<compile_context>
chip_gen: v7x
topology: tpu7x:2x2x1
jax: 0.10.0
libtpu: 0.0.40
codegen_flags: <defaults>
</compile_context>

<pallas_src>
import functools

import jax
import jax.numpy as jnp
from jax.experimental import pallas as pl
from jax.experimental.pallas import tpu as pltpu

LANE = 128                      # lane-dense padded width for hidden / class dims
DEFAULT_TM = 128                # node-row tile; see VMEM note above for sizing
VMEM_LIMIT = 48 * 1024 * 1024   # explicit VMEM budget, safe on v5e / v6e / v7x


def _round_up(v, m):
    return ((v + m - 1) // m) * m


def _compiler_params():
    return pltpu.CompilerParams(
        dimension_semantics=("parallel",),
        vmem_limit_bytes=VMEM_LIMIT,
    )


# --------------------------------------------------------------- kernels ----
def transform_kernel(x_ref, w_ref, out_ref):
    """Per-node feature transform: out = x @ w (bf16 in, f32 accum, bf16 out)."""
    out_ref[...] = jnp.dot(
        x_ref[...], w_ref[...], preferred_element_type=jnp.float32
    ).astype(out_ref.dtype)


def fused_agg_relu_transform_kernel(adj_ref, xw_ref, b1_ref, w2_ref, out_ref):
    """Fused layer-1 aggregation + layer-2 transform:
         out[tile] = relu(A_hat[tile, :] @ xw1 + b1) @ w2
    The transform is row-local, so it fuses for free into the producer tile
    (removes an entire HBM round-trip of the hidden activations)."""
    acc = jnp.dot(adj_ref[...], xw_ref[...], preferred_element_type=jnp.float32)
    h1 = jnp.maximum(acc + b1_ref[...], 0.0).astype(jnp.bfloat16)
    # TODO(synk): training-mode dropout (pltpu.prng_seed / prng_random_bits
    # mask) not wired; eval mode (identity) matches Net.forward at inference.
    out_ref[...] = jnp.dot(
        h1, w2_ref[...], preferred_element_type=jnp.float32
    ).astype(out_ref.dtype)


def agg_logsoftmax_kernel(adj_ref, hw_ref, b2_ref, out_ref):
    """Layer-2 aggregation + log_softmax over the (lane-padded) class dim.
    Pad lanes need no in-kernel mask: w2's pad columns are zero (so acc is 0
    there) and b2's pad lanes are pre-set to -1e30 by the wrapper."""
    acc = jnp.dot(adj_ref[...], hw_ref[...], preferred_element_type=jnp.float32)
    h = acc + b2_ref[...]
    m = jnp.max(h, axis=1, keepdims=True)
    z = h - m
    lse = jnp.log(jnp.sum(jnp.exp(z), axis=1, keepdims=True))
    out_ref[...] = (z - lse).astype(out_ref.dtype)


# -------------------------------------------------------- pallas wrappers ----
def _transform(x, w, *, tm):
    n, k = x.shape
    p = w.shape[1]
    return pl.pallas_call(
        transform_kernel,
        out_shape=jax.ShapeDtypeStruct((n, p), jnp.bfloat16),
        grid=(pl.cdiv(n, tm),),
        in_specs=[
            pl.BlockSpec((tm, k), lambda i: (i, 0)),   # node-row stripe of x
            pl.BlockSpec((k, p), lambda i: (0, 0)),    # weight, resident
        ],
        out_specs=pl.BlockSpec((tm, p), lambda i: (i, 0)),
        compiler_params=_compiler_params(),
    )(x, w)


def _fused_layer1(adj_p, xw1, b1_p, w2_p, *, tm):
    n = adj_p.shape[0]
    hp = xw1.shape[1]
    cp = w2_p.shape[1]
    return pl.pallas_call(
        fused_agg_relu_transform_kernel,
        out_shape=jax.ShapeDtypeStruct((n, cp), jnp.bfloat16),
        grid=(pl.cdiv(n, tm),),
        in_specs=[
            pl.BlockSpec((tm, n), lambda i: (i, 0)),   # adjacency stripe (streamed)
            pl.BlockSpec((n, hp), lambda i: (0, 0)),   # xw1, resident
            pl.BlockSpec((1, hp), lambda i: (0, 0)),   # b1, resident
            pl.BlockSpec((hp, cp), lambda i: (0, 0)),  # w2, resident
        ],
        out_specs=pl.BlockSpec((tm, cp), lambda i: (i, 0)),
        compiler_params=_compiler_params(),
    )(adj_p, xw1, b1_p, w2_p)


def _layer2(adj_p, hw2, b2_p, *, tm):
    n = adj_p.shape[0]
    cp = hw2.shape[1]
    return pl.pallas_call(
        agg_logsoftmax_kernel,
        out_shape=jax.ShapeDtypeStruct((n, cp), jnp.float32),
        grid=(pl.cdiv(n, tm),),
        in_specs=[
            pl.BlockSpec((tm, n), lambda i: (i, 0)),   # adjacency stripe (streamed)
            pl.BlockSpec((n, cp), lambda i: (0, 0)),   # hw2, resident
            pl.BlockSpec((1, cp), lambda i: (0, 0)),   # b2 (-1e30 pad lanes), resident
        ],
        out_specs=pl.BlockSpec((tm, cp), lambda i: (i, 0)),
        compiler_params=_compiler_params(),
    )(adj_p, hw2, b2_p)


@functools.partial(jax.jit, static_argnames=("tm",))
def gcn_forward(adj_p, x, w1, b1, w2, b2, *, tm=DEFAULT_TM):
    """adj_p: pre-padded bf16 normalized adjacency (n_pad, n_pad); x/w/b raw."""
    n, f_in = x.shape
    n_pad = adj_p.shape[0]
    h = w1.shape[1]
    c = w2.shape[1]
    hp = _round_up(h, LANE)
    cp = _round_up(c, LANE)

    # Small operands padded/cast here (O(N*F) / O(F*H) -- cheap, stays jitted).
    x_p = jnp.zeros((n_pad, f_in), jnp.bfloat16).at[:n, :].set(x.astype(jnp.bfloat16))
    w1_p = jnp.zeros((f_in, hp), jnp.bfloat16).at[:, :h].set(w1.astype(jnp.bfloat16))
    b1_p = jnp.zeros((1, hp), jnp.float32).at[:, :h].set(b1.reshape(1, h).astype(jnp.float32))
    w2_p = jnp.zeros((hp, cp), jnp.bfloat16).at[:h, :c].set(w2.astype(jnp.bfloat16))
    # Pad class lanes of b2 to -1e30 so the log-softmax kernel needs no mask.
    b2_p = jnp.full((1, cp), -1e30, jnp.float32).at[:, :c].set(
        b2.reshape(1, c).astype(jnp.float32))

    # Layer 1: (x @ w1) first (cheap-order guard), then the fused
    # aggregation + relu + layer-2 transform.
    xw1 = _transform(x_p, w1_p, tm=tm)                        # (n_pad, hp) bf16
    hw2 = _fused_layer1(adj_p, xw1, b1_p, w2_p, tm=tm)        # (n_pad, cp) bf16

    # Dropout: identity at eval time (self.training == False).

    # Layer 2 aggregation + log_softmax.
    out = _layer2(adj_p, hw2, b2_p, tm=tm)                    # (n_pad, cp) f32
    return out[:n, :c]


# -------------------------------------------------------------- JAX glue ----
def normalized_adjacency(edge_index, num_nodes):
    """GCN normalization: A_hat = D^-1/2 (A + I) D^-1/2 (dense, f32, preprocessing).
    Note: duplicate edges would be double-counted (demo graph has none)."""
    src, dst = edge_index
    a = jnp.zeros((num_nodes, num_nodes), jnp.float32)
    a = a.at[dst, src].add(1.0)                       # messages flow src -> dst
    a = a + jnp.eye(num_nodes, dtype=jnp.float32)     # add self-loops
    deg = jnp.sum(a, axis=1)
    dinv = jnp.where(deg > 0, 1.0 / jnp.sqrt(deg), 0.0)
    return dinv[:, None] * a * dinv[None, :]


def pad_adjacency(adj, *, tm=DEFAULT_TM):
    """One-time preprocessing (hoisted out of the forward pass): pad the N^2
    normalized adjacency to a multiple of tm rows/cols and cast to bf16."""
    n = adj.shape[0]
    n_pad = _round_up(n, tm)
    return jnp.zeros((n_pad, n_pad), jnp.bfloat16).at[:n, :n].set(
        adj.astype(jnp.bfloat16))


def gcn_reference(adj, x, w1, b1, w2, b2):
    h1 = jnp.maximum(adj @ (x @ w1) + b1, 0.0)
    h2 = adj @ (h1 @ w2) + b2
    return jax.nn.log_softmax(h2, axis=1)


if __name__ == "__main__":
    # Small synthetic "Planetoid-like" problem (N chosen to exercise row tiling).
    N, F, H, C = 256, 32, 16, 8

    key = jax.random.PRNGKey(0)
    kx, kw1, kw2 = jax.random.split(key, 3)

    # Node features (mimic T.NormalizeFeatures(): rows sum to 1).
    x_raw = jax.random.uniform(kx, (N, F), jnp.float32)
    x = x_raw / jnp.clip(jnp.sum(x_raw, axis=1, keepdims=True), 1e-12)

    # Deterministic bidirectional ring graph as edge_index.
    idx = jnp.arange(N)
    src = jnp.concatenate([idx, (idx + 1) % N])
    dst = jnp.concatenate([(idx + 1) % N, idx])
    edge_index = jnp.stack([src, dst])

    # Preprocessing (once per graph, cached like GCNConv(cached=True)).
    adj = normalized_adjacency(edge_index, N)
    adj_p = pad_adjacency(adj, tm=DEFAULT_TM)

    # Glorot-style deterministic parameter init (GCNConv weights, zero bias).
    w1 = jax.random.normal(kw1, (F, H), jnp.float32) * jnp.sqrt(2.0 / (F + H))
    b1 = jnp.zeros((H,), jnp.float32)
    w2 = jax.random.normal(kw2, (H, C), jnp.float32) * jnp.sqrt(2.0 / (H + C))
    b2 = jnp.zeros((C,), jnp.float32)

    out = jax.block_until_ready(gcn_forward(adj_p, x, w1, b1, w2, b2))

    assert out.shape == (N, C)
    # log_softmax rows must exponentiate-sum to ~1 (exact in f32).
    assert jnp.allclose(jnp.sum(jnp.exp(out), axis=1), 1.0, atol=1e-4)
    # Match the pure-f32 reference within bf16-input tolerance.
    ref = gcn_reference(adj, x, w1, b1, w2, b2)
    assert jnp.allclose(out, ref, atol=1e-1), float(jnp.max(jnp.abs(out - ref)))
    print("KERNEL_OK")
</pallas_src>

<mosaic_0001>
module attributes {stable_mosaic.version = 11 : i64} {
  func.func @transform_kernel(%arg0: i32, %arg1: memref<128x32xbf16, #tpu.memory_space<vmem>>, %arg2: memref<32x128xbf16, #tpu.memory_space<vmem>>, %arg3: memref<128x128xbf16, #tpu.memory_space<vmem>>) attributes {dimension_semantics = [#tpu.dimension_semantics<parallel>], iteration_bounds = array<i64: 2>, scalar_prefetch = 0 : i64, scratch_operands = 0 : i64, tpu.core_type = #tpu.core_type<tc>, window_params = [{transform_indices = @transform_0, window_bounds = array<i64: 128, 32>}, {pipeline_mode = #tpu.pipeline_mode<synchronous>, transform_indices = @transform_1, window_bounds = array<i64: 32, 128>}, {transform_indices = @transform_2, window_bounds = array<i64: 128, 128>}]} {
    %c0 = arith.constant 0 : index
    %c0_0 = arith.constant 0 : index
    %0 = vector.load %arg1[%c0, %c0_0] : memref<128x32xbf16, #tpu.memory_space<vmem>>, vector<128x32xbf16>
    %c0_1 = arith.constant 0 : index
    %c0_2 = arith.constant 0 : index
    %1 = vector.load %arg2[%c0_1, %c0_2] : memref<32x128xbf16, #tpu.memory_space<vmem>>, vector<32x128xbf16>
    %cst = arith.constant dense<0.000000e+00> : vector<128x128xf32>
    %2 = tpu.matmul %0, %1, %cst {dimension_numbers = #tpu.dot_dimension_numbers<[1], [0], [0], [1], [0, 0, 1, 1], [], []>} : vector<128x32xbf16>, vector<32x128xbf16>, vector<128x128xf32> -> vector<128x128xf32>
    %3 = arith.truncf %2 : vector<128x128xf32> to vector<128x128xbf16>
    %c0_3 = arith.constant 0 : index
    %c0_4 = arith.constant 0 : index
    %4 = vector.load %arg3[%c0_3, %c0_4] : memref<128x128xbf16, #tpu.memory_space<vmem>>, vector<128x128xbf16>
    tpu.vector_store %arg3[%c0_3, %c0_4], %3 {strides = array<i32>} : memref<128x128xbf16, #tpu.memory_space<vmem>>, vector<128x128xbf16>,
    return
  }
  func.func @transform_0(%arg0: i32) -> (i32, i32) {
    %c0_i32 = arith.constant 0 : i32
    %c0_i32_0 = arith.constant 0 : i32
    return %arg0, %c0_i32 : i32, i32
  }
  func.func @transform_1(%arg0: i32) -> (i32, i32) {
    %c0_i32 = arith.constant 0 : i32
    %c0_i32_0 = arith.constant 0 : i32
    %c0_i32_1 = arith.constant 0 : i32
    return %c0_i32, %c0_i32_0 : i32, i32
  }
  func.func @transform_2(%arg0: i32) -> (i32, i32) {
    %c0_i32 = arith.constant 0 : i32
    %c0_i32_0 = arith.constant 0 : i32
    return %arg0, %c0_i32 : i32, i32
  }
}

module attributes {stable_mosaic.version = 11 : i64} {
  func.func @agg_logsoftmax_kernel(%arg0: i32, %arg1: memref<128x256xbf16, #tpu.memory_space<vmem>>, %arg2: memref<256x128xbf16, #tpu.memory_space<vmem>>, %arg3: memref<1x128xf32, #tpu.memory_space<vmem>>, %arg4: memref<128x128xf32, #tpu.memory_space<vmem>>) attributes {dimension_semantics = [#tpu.dimension_semantics<parallel>], iteration_bounds = array<i64: 2>, scalar_prefetch = 0 : i64, scratch_operands = 0 : i64, tpu.core_type = #tpu.core_type<tc>, window_params = [{transform_indices = @transform_0, window_bounds = array<i64: 128, 256>}, {pipeline_mode = #tpu.pipeline_mode<synchronous>, transform_indices = @transform_1, window_bounds = array<i64: 256, 128>}, {pipeline_mode = #tpu.pipeline_mode<synchronous>, transform_indices = @transform_2, window_bounds = array<i64: 1, 128>}, {transform_indices = @transform_3, window_bounds = array<i64: 128, 128>}]} {
    %c0 = arith.constant 0 : index
    %c0_0 = arith.constant 0 : index
    %0 = vector.load %arg1[%c0, %c0_0] : memref<128x256xbf16, #tpu.memory_space<vmem>>, vector<128x256xbf16>
    %c0_1 = arith.constant 0 : index
    %c0_2 = arith.constant 0 : index
    %1 = vector.load %arg2[%c0_1, %c0_2] : memref<256x128xbf16, #tpu.memory_space<vmem>>, vector<256x128xbf16>
    %cst = arith.constant dense<0.000000e+00> : vector<128x128xf32>
    %2 = tpu.matmul %0, %1, %cst {dimension_numbers = #tpu.dot_dimension_numbers<[1], [0], [0], [1], [0, 0, 1, 1], [], []>} : vector<128x256xbf16>, vector<256x128xbf16>, vector<128x128xf32> -> vector<128x128xf32>
    %c0_3 = arith.constant 0 : index
    %c0_4 = arith.constant 0 : index
    %3 = vector.load %arg3[%c0_3, %c0_4] : memref<1x128xf32, #tpu.memory_space<vmem>>, vector<1x128xf32>
    %4 = vector.broadcast %3 : vector<1x128xf32> to vector<128x128xf32>
    %5 = arith.addf %2, %4 : vector<128x128xf32>
    %cst_5 = arith.constant dense<0xFF800000> : vector<128xf32>
    %6 = vector.multi_reduction <maximumf>, %5, %cst_5 [1] : vector<128x128xf32> to vector<128xf32>
    %7 = vector.shape_cast %6 : vector<128xf32> to vector<128x1xf32>
    %8 = vector.broadcast %7 : vector<128x1xf32> to vector<128x128xf32>
    %9 = arith.subf %5, %8 : vector<128x128xf32>
    %10 = math.exp %9 : vector<128x128xf32>
    %cst_6 = arith.constant dense<0.000000e+00> : vector<128xf32>
    %11 = vector.multi_reduction <add>, %10, %cst_6 [1] : vector<128x128xf32> to vector<128xf32>
    %12 = vector.shape_cast %11 : vector<128xf32> to vector<128x1xf32>
    %13 = math.log %12 : vector<128x1xf32>
    %14 = vector.broadcast %13 : vector<128x1xf32> to vector<128x128xf32>
    %15 = arith.subf %9, %14 : vector<128x128xf32>
    %c0_7 = arith.constant 0 : index
    %c0_8 = arith.constant 0 : index
    %16 = vector.load %arg4[%c0_7, %c0_8] : memref<128x128xf32, #tpu.memory_space<vmem>>, vector<128x128xf32>
    tpu.vector_store %arg4[%c0_7, %c0_8], %15 {strides = array<i32>} : memref<128x128xf32, #tpu.memory_space<vmem>>, vector<128x128xf32>,
    return
  }
  func.func @transform_0(%arg0: i32) -> (i32, i32) {
    %c0_i32 = arith.constant 0 : i32
    %c0_i32_0 = arith.constant 0 : i32
    return %arg0, %c0_i32 : i32, i32
  }
  func.func @transform_1(%arg0: i32) -> (i32, i32) {
    %c0_i32 = arith.constant 0 : i32
    %c0_i32_0 = arith.constant 0 : i32
    %c0_i32_1 = arith.constant 0 : i32
    return %c0_i32, %c0_i32_0 : i32, i32
  }
  func.func @transform_2(%arg0: i32) -> (i32, i32) {
    %c0_i32 = arith.constant 0 : i32
    %c0_i32_0 = arith.constant 0 : i32
    %c0_i32_1 = arith.constant 0 : i32
    return %c0_i32, %c0_i32_0 : i32, i32
  }
  func.func @transform_3(%arg0: i32) -> (i32, i32) {
    %c0_i32 = arith.constant 0 : i32
    %c0_i32_0 = arith.constant 0 : i32
    return %arg0, %c0_i32 : i32, i32
  }
}

module attributes {stable_mosaic.version = 11 : i64} {
  func.func @fused_agg_relu_transform_kernel(%arg0: i32, %arg1: memref<128x256xbf16, #tpu.memory_space<vmem>>, %arg2: memref<256x128xbf16, #tpu.memory_space<vmem>>, %arg3: memref<1x128xf32, #tpu.memory_space<vmem>>, %arg4: memref<128x128xbf16, #tpu.memory_space<vmem>>, %arg5: memref<128x128xbf16, #tpu.memory_space<vmem>>) attributes {dimension_semantics = [#tpu.dimension_semantics<parallel>], iteration_bounds = array<i64: 2>, scalar_prefetch = 0 : i64, scratch_operands = 0 : i64, tpu.core_type = #tpu.core_type<tc>, window_params = [{transform_indices = @transform_0, window_bounds = array<i64: 128, 256>}, {pipeline_mode = #tpu.pipeline_mode<synchronous>, transform_indices = @transform_1, window_bounds = array<i64: 256, 128>}, {pipeline_mode = #tpu.pipeline_mode<synchronous>, transform_indices = @transform_2, window_bounds = array<i64: 1, 128>}, {pipeline_mode = #tpu.pipeline_mode<synchronous>, transform_indices = @transform_3, window_bounds = array<i64: 128, 128>}, {transform_indices = @transform_4, window_bounds = array<i64: 128, 128>}]} {
    %c0 = arith.constant 0 : index
    %c0_0 = arith.constant 0 : index
    %0 = vector.load %arg1[%c0, %c0_0] : memref<128x256xbf16, #tpu.memory_space<vmem>>, vector<128x256xbf16>
    %c0_1 = arith.constant 0 : index
    %c0_2 = arith.constant 0 : index
    %1 = vector.load %arg2[%c0_1, %c0_2] : memref<256x128xbf16, #tpu.memory_space<vmem>>, vector<256x128xbf16>
    %cst = arith.constant dense<0.000000e+00> : vector<128x128xf32>
    %2 = tpu.matmul %0, %1, %cst {dimension_numbers = #tpu.dot_dimension_numbers<[1], [0], [0], [1], [0, 0, 1, 1], [], []>} : vector<128x256xbf16>, vector<256x128xbf16>, vector<128x128xf32> -> vector<128x128xf32>
    %c0_3 = arith.constant 0 : index
    %c0_4 = arith.constant 0 : index
    %3 = vector.load %arg3[%c0_3, %c0_4] : memref<1x128xf32, #tpu.memory_space<vmem>>, vector<1x128xf32>
    %4 = vector.broadcast %3 : vector<1x128xf32> to vector<128x128xf32>
    %5 = arith.addf %2, %4 : vector<128x128xf32>
    %cst_5 = arith.constant 0.000000e+00 : f32
    %6 = vector.broadcast %cst_5 : f32 to vector<128x128xf32>
    %7 = arith.maximumf %5, %6 : vector<128x128xf32>
    %8 = arith.truncf %7 : vector<128x128xf32> to vector<128x128xbf16>
    %c0_6 = arith.constant 0 : index
    %c0_7 = arith.constant 0 : index
    %9 = vector.load %arg4[%c0_6, %c0_7] : memref<128x128xbf16, #tpu.memory_space<vmem>>, vector<128x128xbf16>
    %cst_8 = arith.constant dense<0.000000e+00> : vector<128x128xf32>
    %10 = tpu.matmul %8, %9, %cst_8 {dimension_numbers = #tpu.dot_dimension_numbers<[1], [0], [0], [1], [0, 0, 1, 1], [], []>} : vector<128x128xbf16>, vector<128x128xbf16>, vector<128x128xf32> -> vector<128x128xf32>
    %11 = arith.truncf %10 : vector<128x128xf32> to vector<128x128xbf16>
    %c0_9 = arith.constant 0 : index
    %c0_10 = arith.constant 0 : index
    %12 = vector.load %arg5[%c0_9, %c0_10] : memref<128x128xbf16, #tpu.memory_space<vmem>>, vector<128x128xbf16>
    tpu.vector_store %arg5[%c0_9, %c0_10], %11 {strides = array<i32>} : memref<128x128xbf16, #tpu.memory_space<vmem>>, vector<128x128xbf16>,
    return
  }
  func.func @transform_0(%arg0: i32) -> (i32, i32) {
    %c0_i32 = arith.constant 0 : i32
    %c0_i32_0 = arith.constant 0 : i32
    return %arg0, %c0_i32 : i32, i32
  }
  func.func @transform_1(%arg0: i32) -> (i32, i32) {
    %c0_i32 = arith.constant 0 : i32
    %c0_i32_0 = arith.constant 0 : i32
    %c0_i32_1 = arith.constant 0 : i32
    return %c0_i32, %c0_i32_0 : i32, i32
  }
  func.func @transform_2(%arg0: i32) -> (i32, i32) {
    %c0_i32 = arith.constant 0 : i32
    %c0_i32_0 = arith.constant 0 : i32
    %c0_i32_1 = arith.constant 0 : i32
    return %c0_i32, %c0_i32_0 : i32, i32
  }
  func.func @transform_3(%arg0: i32) -> (i32, i32) {
    %c0_i32 = arith.constant 0 : i32
    %c0_i32_0 = arith.constant 0 : i32
    %c0_i32_1 = arith.constant 0 : i32
    return %c0_i32, %c0_i32_0 : i32, i32
  }
  func.func @transform_4(%arg0: i32) -> (i32, i32) {
    %c0_i32 = arith.constant 0 : i32
    %c0_i32_0 = arith.constant 0 : i32
    return %arg0, %c0_i32 : i32, i32
  }
}

</mosaic_0001>

<llo_original>
// kernel: gcn_forward.3
$region0: #{gcn_forward.3}
  #allocation0 [shape = 'u32[]', space=smem, size = 0x4, offset = 0x4, fixed_abs, tag = 'smem constant byte address 0x4 - core index']
  #allocation1 [shape = 'u32[144,128]{1,0:T(1,128)}', space=vmem, size = 0x12000, scoped, tag = 'internal scratch']
  %s0 = inlined_call_operand.vmem [shape: bf16[256,32], index: 0, kind: input, shape index: {}]
  %s1 = inlined_call_operand.vmem [shape: bf16[32,128], index: 1, kind: input, shape index: {}]
  %s2 = inlined_call_operand.vmem [shape: bf16[256,128], index: 2, kind: output, shape index: {}]
  %s3 = sld [smem:[#allocation0]]
  $region41: #{gcn_forward.3} parent=0
    _
  %s5 = ssub.s32 1, %s3
  %s6 = scalar_select 0, %s5, %s3
  loop: start=0, step=1, limit=4
  $region2: #{gcn_forward.3} parent=0 // loop_pre_header
    _
  $region3: #{gcn_forward.3} parent=0 // loop_header
    %s8 = sphi 0, %s12
    %p9 = scmp.ge.s32.totalorder %s8, 4
    %s18 = sphi 0, %s20
    %s21 = sphi 0, %s18
    %s22 = sphi 0, %s21
    %s38 = sphi 0, %s22
    %s42 = sphi 0, %s42
    %s44 = sphi 0, %s42
    %s45 = sphi 0, %s44
    %s59 = sphi 0, %s45
    %s65 = sphi 0, %s67
    %s68 = sphi 0, %s65
    %s69 = sphi 0, %s68
    %s85 = sphi 0, %s69
  $region4: #{gcn_forward.3} parent=0 // loop_header_branch
    %11 = sbr.rel (%p9) target = $region8
  $region5: #{gcn_forward.3} parent=0 // loop_body
    %s13 = ssub.s32 %s8, 1
    %s14 = ssub.s32 %s8, 2
    %s15 = sadd.s32 %s8, 1
    %s16 = ssub.s32 %s8, %s15
    %p17 = scmp.eq.s32.totalorder %s16, 0
    %s19 = sadd.s32 %s18, 1
    %s20 = scalar_select %p17, %s18, %s19
    %p23 = pneg %p17
    %p24 = scmp.eq.s32.totalorder %s8, 1
    %p25 = por %p23, %p24
    %p26 = scmp.ne.s32.totalorder %s18, %s21
    %p27 = scmp.eq.s32.totalorder %s8, 0
    %p28 = por %p26, %p27
    %p29 = scmp.ne.s32.totalorder %s18, %s21
    %p30 = scmp.eq.s32.totalorder %s13, 1
    %p31 = por %p29, %p30
    %p32 = scmp.ne.s32.totalorder %s21, %s22
    %p33 = scmp.eq.s32.totalorder %s13, 0
    %p34 = por %p32, %p33
    %p35 = scmp.ne.s32.totalorder %s21, %s22
    %p36 = scmp.eq.s32.totalorder %s14, 1
    %p37 = por %p35, %p36
    %p39 = scmp.ne.s32.totalorder %s22, %s38
    %p40 = scmp.eq.s32.totalorder %s14, 0
    %p41 = por %p39, %p40
    %s43 = sadd.s32 %s42, 1
    %p46 = scmp.eq.s32.totalorder %s8, 1
    %p47 = scmp.ne.s32.totalorder %s42, %s44
    %p48 = scmp.eq.s32.totalorder %s8, 0
    %p49 = por %p47, %p48
    %p50 = scmp.ne.s32.totalorder %s42, %s44
    %p51 = scmp.eq.s32.totalorder %s13, 1
    %p52 = por %p50, %p51
    %p53 = scmp.ne.s32.totalorder %s44, %s45
    %p54 = scmp.eq.s32.totalorder %s13, 0
    %p55 = por %p53, %p54
    %p56 = scmp.ne.s32.totalorder %s44, %s45
    %p57 = scmp.eq.s32.totalorder %s14, 1
    %p58 = por %p56, %p57
    %p60 = scmp.ne.s32.totalorder %s45, %s59
    %p61 = scmp.eq.s32.totalorder %s14, 0
    %p62 = por %p60, %p61
    %s63 = ssub.s32 %s8, %s15
    %p64 = scmp.eq.s32.totalorder %s63, 0
    %s66 = sadd.s32 %s65, 1
    %s67 = scalar_select %p64, %s65, %s66
    %p70 = pneg %p64
    %p71 = scmp.eq.s32.totalorder %s8, 1
    %p72 = por %p70, %p71
    %p73 = scmp.ne.s32.totalorder %s65, %s68
    %p74 = scmp.eq.s32.totalorder %s8, 0
    %p75 = por %p73, %p74
    %p76 = scmp.ne.s32.totalorder %s65, %s68
    %p77 = scmp.eq.s32.totalorder %s13, 1
    %p78 = por %p76, %p77
    %p79 = scmp.ne.s32.totalorder %s68, %s69
    %p80 = scmp.eq.s32.totalorder %s13, 0
    %p81 = por %p79, %p80
    %p82 = scmp.ne.s32.totalorder %s68, %s69
    %p83 = scmp.eq.s32.totalorder %s14, 1
    %p84 = por %p82, %p83
    %p86 = scmp.ne.s32.totalorder %s69, %s85
    %p87 = scmp.eq.s32.totalorder %s14, 0
    %p88 = por %p86, %p87
    %p89 = scmp.le.s32.totalorder 1, %s8
    %p90 = scmp.lt.s32.totalorder %s8, 3
    %p91 = pnand %p89, %p90
    %p92 = pneg %p91
    // Predicated region
    $region9: #{gcn_forward.3} parent=5 // pred_check
      _
    $region10: #{gcn_forward.3} parent=5 // pred_check_branch
      %94 = sbr.rel (%p91) target = $region12
    $region11: #{gcn_forward.3} parent=5 // pred_region
      %s95 = ssub.s32 %s8, 1
      // Predicated region
      $region13: #{gcn_forward.3} parent=11 // pred_check
        %p96 = pneg %p55
      $region14: #{gcn_forward.3} parent=11 // pred_check_branch
        %98 = sbr.rel (%p96) target = $region16
      $region15: #{gcn_forward.3} parent=11 // pred_region
        _
      $region16: #{gcn_forward.3} parent=11 // pred_fallthru
        _
    $region12: #{gcn_forward.3} parent=5 // pred_fallthru
      _
    %p99 = scmp.lt.s32.totalorder %s8, 2
    // Predicated region
    $region17: #{gcn_forward.3} parent=5 // pred_check
      %p100 = pneg %p99
    $region18: #{gcn_forward.3} parent=5 // pred_check_branch
      %102 = sbr.rel (%p100) target = $region20
    $region19: #{gcn_forward.3} parent=5 // pred_region
      // Predicated region
      $region21: #{gcn_forward.3} parent=19 // pred_check
        %p103 = pneg %p28
      $region22: #{gcn_forward.3} parent=19 // pred_check_branch
        %105 = sbr.rel (%p103) target = $region24
      $region23: #{gcn_forward.3} parent=19 // pred_region
        %s106 = smul.u32 16, %s8
        %p107 = scmp.lt.s32.totalorder %s106, 31
        %s108 = scalar_select %p107, %s106, 31
        %s109 = smul.addr %s108, 4
        %s110 = scalar_lea.vmem %s0, %s109
        %s111 = smul.u32 16, %s8
      $region24: #{gcn_forward.3} parent=19 // pred_fallthru
        _
    $region20: #{gcn_forward.3} parent=5 // pred_fallthru
      _
    %p112 = scmp.le.s32.totalorder 1, %s8
    %p113 = scmp.lt.s32.totalorder %s8, 3
    %p114 = pnand %p112, %p113
    %p115 = pneg %p114
    // Predicated region
    $region25: #{gcn_forward.3} parent=5 // pred_check
      _
    $region26: #{gcn_forward.3} parent=5 // pred_check_branch
      %117 = sbr.rel (%p114) target = $region28
    $region27: #{gcn_forward.3} parent=5 // pred_region
      %s118 = ssub.s32 %s8, 1
      %s119 = smul.u32 16, %s13
      %p120 = scmp.lt.s32.totalorder %s119, 31
      %s121 = scalar_select %p120, %s119, 31
      %s122 = smul.addr %s121, 4
      %s123 = scalar_lea.vmem %s0, %s122
      %p124 = pneg %p34
      %p125 = pneg %p31
      %p126 = pneg %p55
      %p127 = pneg %p52
      %p128 = pneg %p81
      %p129 = pneg %p78
      %s130 = smul.u32 16, %s13
      %p131 = scmp.lt.s32.totalorder %s130, 31
      %s132 = scalar_select %p131, %s130, 31
      %s133 = smul.addr %s132, 4
      %s134 = scalar_lea.vmem %s2, %s133
      %s135 = smul.u32 16, %s13
      %p136 = scmp.lt.s32.totalorder %s135, 31
      %s137 = scalar_select %p136, %s135, 31
      %s138 = smul.addr %s137, 4
      %s139 = scalar_lea.vmem %s0, %s138
      %s140 = smul.u32 16, %s13
      %s141 = smul.u32 16, %s13
      %p142 = scmp.lt.s32.totalorder %s141, 31
      %s143 = scalar_select %p142, %s141, 31
      %s144 = smul.addr %s143, 4
      %s145 = scalar_lea.vmem %s2, %s144
      %s146 = smul.u32 16, %s13
      %v148 = vld [vmem:[%s139] sm:$0xf]
      %v149 = vld [vmem:[%s139 + $0x4] sm:$0xf]
      %v150 = vld [vmem:[%s139 + $0x8] sm:$0xf]
      %v151 = vld [vmem:[%s139 + $0xc] sm:$0xf]
      %v152 = vld [vmem:[%s139 + $0x10] sm:$0xf]
      %v153 = vld [vmem:[%s139 + $0x14] sm:$0xf]
      %v154 = vld [vmem:[%s139 + $0x18] sm:$0xf]
      %v155 = vld [vmem:[%s139 + $0x1c] sm:$0xf]
      %v156 = vld [vmem:[%s139 + $0x20] sm:$0xf]
      %v157 = vld [vmem:[%s139 + $0x24] sm:$0xf]
      %v158 = vld [vmem:[%s139 + $0x28] sm:$0xf]
      %v159 = vld [vmem:[%s139 + $0x2c] sm:$0xf]
      %v160 = vld [vmem:[%s139 + $0x30] sm:$0xf]
      %v161 = vld [vmem:[%s139 + $0x34] sm:$0xf]
      %v162 = vld [vmem:[%s139 + $0x38] sm:$0xf]
      %v163 = vld [vmem:[%s139 + $0x3c] sm:$0xf]
      %v164 = vld [vmem:[%s1] sm:$0xf]
      %v165 = vld [vmem:[%s1 + $0x4] sm:$0xf]
      %v166 = vld [vmem:[%s1 + $0x8] sm:$0xf]
      %v167 = vld [vmem:[%s1 + $0xc] sm:$0xf]
      %v184 = vunpack.c.l.b16 %v148
      %v185 = vunpack.c.l.b16 %v149
      %v186 = vunpack.c.l.b16 %v150
      %v187 = vunpack.c.l.b16 %v151
      %v188 = vunpack.c.l.b16 %v152
      %v189 = vunpack.c.l.b16 %v153
      %v190 = vunpack.c.l.b16 %v154
      %v191 = vunpack.c.l.b16 %v155
      %v192 = vunpack.c.l.b16 %v156
      %v193 = vunpack.c.l.b16 %v157
      %v194 = vunpack.c.l.b16 %v158
      %v195 = vunpack.c.l.b16 %v159
      %v196 = vunpack.c.l.b16 %v160
      %v197 = vunpack.c.l.b16 %v161
      %v198 = vunpack.c.l.b16 %v162
      %v199 = vunpack.c.l.b16 %v163
      %v200 = vpack.c.b16 %v185, %v184
      %v201 = vpack.c.b16 %v187, %v186
      %v202 = vpack.c.b16 %v189, %v188
      %v203 = vpack.c.b16 %v191, %v190
      %v204 = vpack.c.b16 %v193, %v192
      %v205 = vpack.c.b16 %v195, %v194
      %v206 = vpack.c.b16 %v197, %v196
      %v207 = vpack.c.b16 %v199, %v198
      %v212 = vunpack.c.l.b16 %v164
      %v213 = vunpack.c.l.b16 %v165
      %v214 = vunpack.c.l.b16 %v166
      %v215 = vunpack.c.l.b16 %v167
      %v216 = vpack.c.b16 %v213, %v212
      %v217 = vpack.c.b16 %v215, %v214
      %vm220 = vcmask 261120
      %v222 = vsel %vm220, %v200, 0
      %v225 = vsel %vm220, %v201, 0
      %v228 = vsel %vm220, %v202, 0
      %v231 = vsel %vm220, %v203, 0
      %v234 = vsel %vm220, %v204, 0
      %v237 = vsel %vm220, %v205, 0
      %v240 = vsel %vm220, %v206, 0
      %v243 = vsel %vm220, %v207, 0
      %245 = vmatprep.subr.bf16.mxu0 0
      %246 = vmatpush1.bf16.msra.mxu0 %v216
      %247 = vmatprep.subr.bf16.mxu0 0
      %248 = vmatpush1.bf16.msra.mxu0 %v217
      %249 = vmatprep.subr.bf16.mxu0 0
      %250 = vmatpush1.bf16.msra.mxu0 0
      %251 = vmatprep.subr.bf16.mxu0 0
      %252 = vmatpush1.bf16.msra.mxu0 0
      %253 = vmatprep.subr.bf16.mxu0 0
      %254 = vmatpush1.bf16.msra.mxu0 0
      %255 = vmatprep.subr.bf16.mxu0 0
      %256 = vmatpush1.bf16.msra.mxu0 0
      %257 = vmatprep.subr.bf16.mxu0 0
      %258 = vmatpush1.bf16.msra.mxu0 0
      %259 = vmatprep.subr.bf16.mxu0 0
      %260 = vmatpush1.bf16.msra.mxu0 0
      %261 = vmatprep.subr.bf16.mxu0 0
      %262 = vmatpush1.bf16.msra.mxu0 0
      %263 = vmatprep.subr.bf16.mxu0 0
      %264 = vmatpush1.bf16.msra.mxu0 0
      %265 = vmatprep.subr.bf16.mxu0 0
      %266 = vmatpush1.bf16.msra.mxu0 0
      %267 = vmatprep.subr.bf16.mxu0 0
      %268 = vmatpush1.bf16.msra.mxu0 0
      %269 = vmatprep.subr.bf16.mxu0 0
      %270 = vmatpush1.bf16.msra.mxu0 0
      %271 = vmatprep.subr.bf16.mxu0 0
      %272 = vmatpush1.bf16.msra.mxu0 0
      %273 = vmatprep.subr.bf16.mxu0 0
      %274 = vmatpush1.bf16.msra.mxu0 0
      %275 = vmatprep.subr.bf16.mxu0 0
      %276 = vmatpush1.bf16.msra.mxu0 0
      %277 = vmatprep.mubr.bf16.mxu0 0
      %278 = vmatmul.mubr.bf16.gmra.mrb[0].mxu0 %v222
      %v279 = vpop.f32.mrb[0].mxu0
      %v280 = vadd.f32 0.0, %v279
      %v281 = vpop.f32.mrb[0].mxu0
      %v282 = vpop.f32.mrb[0].mxu0
      %v283 = vadd.f32 0.0, %v282
      %v284 = vpop.f32.mrb[0].mxu0
      %285 = vmatprep.mubr.bf16.mxu0 0
      %286 = vmatmul.mubr.bf16.gmra.mrb[0].mxu0 %v225
      %v287 = vpop.f32.mrb[0].mxu0
      %v288 = vadd.f32 0.0, %v287
      %v289 = vpop.f32.mrb[0].mxu0
      %v290 = vpop.f32.mrb[0].mxu0
      %v291 = vadd.f32 0.0, %v290
      %v292 = vpop.f32.mrb[0].mxu0
      %293 = vmatprep.mubr.bf16.mxu0 0
      %294 = vmatmul.mubr.bf16.gmra.mrb[0].mxu0 %v228
      %v295 = vpop.f32.mrb[0].mxu0
      %v296 = vadd.f32 0.0, %v295
      %v297 = vpop.f32.mrb[0].mxu0
      %v298 = vpop.f32.mrb[0].mxu0
      %v299 = vadd.f32 0.0, %v298
      %v300 = vpop.f32.mrb[0].mxu0
      %301 = vmatprep.mubr.bf16.mxu0 0
      %302 = vmatmul.mubr.bf16.gmra.mrb[0].mxu0 %v231
      %v303 = vpop.f32.mrb[0].mxu0
      %v304 = vadd.f32 0.0, %v303
      %v305 = vpop.f32.mrb[0].mxu0
      %v306 = vpop.f32.mrb[0].mxu0
      %v307 = vadd.f32 0.0, %v306
      %v308 = vpop.f32.mrb[0].mxu0
      %309 = vmatprep.mubr.bf16.mxu0 0
      %310 = vmatmul.mubr.bf16.gmra.mrb[0].mxu0 %v234
      %v311 = vpop.f32.mrb[0].mxu0
      %v312 = vadd.f32 0.0, %v311
      %v313 = vpop.f32.mrb[0].mxu0
      %v314 = vpop.f32.mrb[0].mxu0
      %v315 = vadd.f32 0.0, %v314
      %v316 = vpop.f32.mrb[0].mxu0
      %317 = vmatprep.mubr.bf16.mxu0 0
      %318 = vmatmul.mubr.bf16.gmra.mrb[0].mxu0 %v237
      %v319 = vpop.f32.mrb[0].mxu0
      %v320 = vadd.f32 0.0, %v319
      %v321 = vpop.f32.mrb[0].mxu0
      %v322 = vpop.f32.mrb[0].mxu0
      %v323 = vadd.f32 0.0, %v322
      %v324 = vpop.f32.mrb[0].mxu0
      %325 = vmatprep.mubr.bf16.mxu0 0
      %326 = vmatmul.mubr.bf16.gmra.mrb[0].mxu0 %v240
      %v327 = vpop.f32.mrb[0].mxu0
      %v328 = vadd.f32 0.0, %v327
      %v329 = vpop.f32.mrb[0].mxu0
      %v330 = vpop.f32.mrb[0].mxu0
      %v331 = vadd.f32 0.0, %v330
      %v332 = vpop.f32.mrb[0].mxu0
      %333 = vmatprep.mubr.bf16.mxu0 0
      %334 = vmatmul.mubr.bf16.gmra.mrb[0].mxu0 %v243
      %v335 = vpop.f32.mrb[0].mxu0
      %v336 = vadd.f32 0.0, %v335
      %v337 = vpop.f32.mrb[0].mxu0
      %v338 = vpop.f32.mrb[0].mxu0
      %v339 = vadd.f32 0.0, %v338
      %v340 = vpop.f32.mrb[0].mxu0
      %341 = vdwg.mxu0
      %v342 = vpack.c.bf16 %v283, %v280
      %v343 = vpack.c.bf16 %v291, %v288
      %v344 = vpack.c.bf16 %v299, %v296
      %v345 = vpack.c.bf16 %v307, %v304
      %v346 = vpack.c.bf16 %v315, %v312
      %v347 = vpack.c.bf16 %v323, %v320
      %v348 = vpack.c.bf16 %v331, %v328
      %v349 = vpack.c.bf16 %v339, %v336
      %v358 = vunpack.c.l.b16 %v342
      %v359 = vunpack.c.h.b16 %v342
      %v360 = vunpack.c.l.b16 %v343
      %v361 = vunpack.c.h.b16 %v343
      %v362 = vunpack.c.l.b16 %v344
      %v363 = vunpack.c.h.b16 %v344
      %v364 = vunpack.c.l.b16 %v345
      %v365 = vunpack.c.h.b16 %v345
      %v366 = vunpack.c.l.b16 %v346
      %v367 = vunpack.c.h.b16 %v346
      %v368 = vunpack.c.l.b16 %v347
      %v369 = vunpack.c.h.b16 %v347
      %v370 = vunpack.c.l.b16 %v348
      %v371 = vunpack.c.h.b16 %v348
      %v372 = vunpack.c.l.b16 %v349
      %v373 = vunpack.c.h.b16 %v349
      %v374 = vpack.c.b16 %v358, %v358
      %v375 = vpack.c.b16 %v359, %v359
      %v376 = vpack.c.b16 %v360, %v360
      %v377 = vpack.c.b16 %v361, %v361
      %v378 = vpack.c.b16 %v362, %v362
      %v379 = vpack.c.b16 %v363, %v363
      %v380 = vpack.c.b16 %v364, %v364
      %v381 = vpack.c.b16 %v365, %v365
      %v382 = vpack.c.b16 %v366, %v366
      %v383 = vpack.c.b16 %v367, %v367
      %v384 = vpack.c.b16 %v368, %v368
      %v385 = vpack.c.b16 %v369, %v369
      %v386 = vpack.c.b16 %v370, %v370
      %v387 = vpack.c.b16 %v371, %v371
      %v388 = vpack.c.b16 %v372, %v372
      %v389 = vpack.c.b16 %v373, %v373
      %406 = vst [vmem:[%s145] sm:$0xf] %v374
      %407 = vst [vmem:[%s145 + $0x4] sm:$0xf] %v375
      %408 = vst [vmem:[%s145 + $0x8] sm:$0xf] %v376
      %409 = vst [vmem:[%s145 + $0xc] sm:$0xf] %v377
      %410 = vst [vmem:[%s145 + $0x10] sm:$0xf] %v378
      %411 = vst [vmem:[%s145 + $0x14] sm:$0xf] %v379
      %412 = vst [vmem:[%s145 + $0x18] sm:$0xf] %v380
      %413 = vst [vmem:[%s145 + $0x1c] sm:$0xf] %v381
      %414 = vst [vmem:[%s145 + $0x20] sm:$0xf] %v382
      %415 = vst [vmem:[%s145 + $0x24] sm:$0xf] %v383
      %416 = vst [vmem:[%s145 + $0x28] sm:$0xf] %v384
      %417 = vst [vmem:[%s145 + $0x2c] sm:$0xf] %v385
      %418 = vst [vmem:[%s145 + $0x30] sm:$0xf] %v386
      %419 = vst [vmem:[%s145 + $0x34] sm:$0xf] %v387
      %420 = vst [vmem:[%s145 + $0x38] sm:$0xf] %v388
      %421 = vst [vmem:[%s145 + $0x3c] sm:$0xf] %v389
      %s422 = smul.u32 16, %s13
      %p423 = scmp.lt.s32.totalorder %s422, 31
      %s424 = scalar_select %p423, %s422, 31
      %s425 = smul.addr %s424, 4
      %s426 = scalar_lea.vmem %s2, %s425
      // Predicated region
      $region29: #{gcn_forward.3} parent=27 // pred_check
        %p427 = pneg %p78
      $region30: #{gcn_forward.3} parent=27 // pred_check_branch
        %429 = sbr.rel (%p427) target = $region32
      $region31: #{gcn_forward.3} parent=27 // pred_region
        %s430 = smul.u32 16, %s13
      $region32: #{gcn_forward.3} parent=27 // pred_fallthru
        _
    $region28: #{gcn_forward.3} parent=5 // pred_fallthru
      _
    %p431 = scmp.le.s32.totalorder 2, %s8
    // Predicated region
    $region33: #{gcn_forward.3} parent=5 // pred_check
      %p432 = pneg %p431
    $region34: #{gcn_forward.3} parent=5 // pred_check_branch
      %434 = sbr.rel (%p432) target = $region36
    $region35: #{gcn_forward.3} parent=5 // pred_region
      %s435 = ssub.s32 %s8, 2
      // Predicated region
      $region37: #{gcn_forward.3} parent=35 // pred_check
        %p436 = pneg %p84
      $region38: #{gcn_forward.3} parent=35 // pred_check_branch
        %438 = sbr.rel (%p436) target = $region40
      $region39: #{gcn_forward.3} parent=35 // pred_region
        %s439 = smul.u32 16, %s14
        %p440 = scmp.lt.s32.totalorder %s439, 31
        %s441 = scalar_select %p440, %s439, 31
        %s442 = smul.addr %s441, 4
        %s443 = scalar_lea.vmem %s2, %s442
      $region40: #{gcn_forward.3} parent=35 // pred_fallthru
        _
    $region36: #{gcn_forward.3} parent=5 // pred_fallthru
      _
  $region6: #{gcn_forward.3} parent=0 // loop_footer
    %s12 = sadd.s32 1, %s8
  $region7: #{gcn_forward.3} parent=0 // loop_footer_branch
    %7 = sbr.rel target = $region3
  $region8: #{gcn_forward.3} parent=0 // loop_exit
    _

// kernel: gcn_forward.5
$region0: #{gcn_forward.5}
  #allocation0 [shape = 'u32[]', space=smem, size = 0x4, offset = 0x4, fixed_abs, tag = 'smem constant byte address 0x4 - core index']
  #allocation1 [shape = 'u32[144,128]{1,0:T(1,128)}', space=vmem, size = 0x12000, scoped, tag = 'internal scratch']
  %s0 = inlined_call_operand.vmem [shape: bf16[256,256], index: 0, kind: input, shape index: {}]
  %s1 = inlined_call_operand.vmem [shape: bf16[256,128], index: 1, kind: input, shape index: {}]
  %s2 = inlined_call_operand.vmem [shape: f32[1,128], index: 2, kind: input, shape index: {}]
  %s3 = inlined_call_operand.vmem [shape: f32[256,128], index: 3, kind: output, shape index: {}]
  %s4 = sld [smem:[#allocation0]]
  $region45: #{gcn_forward.5} parent=0
    _
  %s6 = ssub.s32 1, %s4
  %s7 = scalar_select 0, %s6, %s4
  loop: start=0, step=1, limit=4
  $region2: #{gcn_forward.5} parent=0 // loop_pre_header
    _
  $region3: #{gcn_forward.5} parent=0 // loop_header
    %s9 = sphi 0, %s13
    %p10 = scmp.ge.s32.totalorder %s9, 4
    %s19 = sphi 0, %s21
    %s22 = sphi 0, %s19
    %s23 = sphi 0, %s22
    %s39 = sphi 0, %s23
    %s43 = sphi 0, %s43
    %s45 = sphi 0, %s43
    %s46 = sphi 0, %s45
    %s60 = sphi 0, %s46
    %s64 = sphi 0, %s64
    %s66 = sphi 0, %s64
    %s67 = sphi 0, %s66
    %s81 = sphi 0, %s67
    %s87 = sphi 0, %s89
    %s90 = sphi 0, %s87
    %s91 = sphi 0, %s90
    %s107 = sphi 0, %s91
  $region4: #{gcn_forward.5} parent=0 // loop_header_branch
    %12 = sbr.rel (%p10) target = $region8
  $region5: #{gcn_forward.5} parent=0 // loop_body
    %s14 = ssub.s32 %s9, 1
    %s15 = ssub.s32 %s9, 2
    %s16 = sadd.s32 %s9, 1
    %s17 = ssub.s32 %s9, %s16
    %p18 = scmp.eq.s32.totalorder %s17, 0
    %s20 = sadd.s32 %s19, 1
    %s21 = scalar_select %p18, %s19, %s20
    %p24 = pneg %p18
    %p25 = scmp.eq.s32.totalorder %s9, 1
    %p26 = por %p24, %p25
    %p27 = scmp.ne.s32.totalorder %s19, %s22
    %p28 = scmp.eq.s32.totalorder %s9, 0
    %p29 = por %p27, %p28
    %p30 = scmp.ne.s32.totalorder %s19, %s22
    %p31 = scmp.eq.s32.totalorder %s14, 1
    %p32 = por %p30, %p31
    %p33 = scmp.ne.s32.totalorder %s22, %s23
    %p34 = scmp.eq.s32.totalorder %s14, 0
    %p35 = por %p33, %p34
    %p36 = scmp.ne.s32.totalorder %s22, %s23
    %p37 = scmp.eq.s32.totalorder %s15, 1
    %p38 = por %p36, %p37
    %p40 = scmp.ne.s32.totalorder %s23, %s39
    %p41 = scmp.eq.s32.totalorder %s15, 0
    %p42 = por %p40, %p41
    %s44 = sadd.s32 %s43, 1
    %p47 = scmp.eq.s32.totalorder %s9, 1
    %p48 = scmp.ne.s32.totalorder %s43, %s45
    %p49 = scmp.eq.s32.totalorder %s9, 0
    %p50 = por %p48, %p49
    %p51 = scmp.ne.s32.totalorder %s43, %s45
    %p52 = scmp.eq.s32.totalorder %s14, 1
    %p53 = por %p51, %p52
    %p54 = scmp.ne.s32.totalorder %s45, %s46
    %p55 = scmp.eq.s32.totalorder %s14, 0
    %p56 = por %p54, %p55
    %p57 = scmp.ne.s32.totalorder %s45, %s46
    %p58 = scmp.eq.s32.totalorder %s15, 1
    %p59 = por %p57, %p58
    %p61 = scmp.ne.s32.totalorder %s46, %s60
    %p62 = scmp.eq.s32.totalorder %s15, 0
    %p63 = por %p61, %p62
    %s65 = sadd.s32 %s64, 1
    %p68 = scmp.eq.s32.totalorder %s9, 1
    %p69 = scmp.ne.s32.totalorder %s64, %s66
    %p70 = scmp.eq.s32.totalorder %s9, 0
    %p71 = por %p69, %p70
    %p72 = scmp.ne.s32.totalorder %s64, %s66
    %p73 = scmp.eq.s32.totalorder %s14, 1
    %p74 = por %p72, %p73
    %p75 = scmp.ne.s32.totalorder %s66, %s67
    %p76 = scmp.eq.s32.totalorder %s14, 0
    %p77 = por %p75, %p76
    %p78 = scmp.ne.s32.totalorder %s66, %s67
    %p79 = scmp.eq.s32.totalorder %s15, 1
    %p80 = por %p78, %p79
    %p82 = scmp.ne.s32.totalorder %s67, %s81
    %p83 = scmp.eq.s32.totalorder %s15, 0
    %p84 = por %p82, %p83
    %s85 = ssub.s32 %s9, %s16
    %p86 = scmp.eq.s32.totalorder %s85, 0
    %s88 = sadd.s32 %s87, 1
    %s89 = scalar_select %p86, %s87, %s88
    %p92 = pneg %p86
    %p93 = scmp.eq.s32.totalorder %s9, 1
    %p94 = por %p92, %p93
    %p95 = scmp.ne.s32.totalorder %s87, %s90
    %p96 = scmp.eq.s32.totalorder %s9, 0
    %p97 = por %p95, %p96
    %p98 = scmp.ne.s32.totalorder %s87, %s90
    %p99 = scmp.eq.s32.totalorder %s14, 1
    %p100 = por %p98, %p99
    %p101 = scmp.ne.s32.totalorder %s90, %s91
    %p102 = scmp.eq.s32.totalorder %s14, 0
    %p103 = por %p101, %p102
    %p104 = scmp.ne.s32.totalorder %s90, %s91
    %p105 = scmp.eq.s32.totalorder %s15, 1
    %p106 = por %p104, %p105
    %p108 = scmp.ne.s32.totalorder %s91, %s107
    %p109 = scmp.eq.s32.totalorder %s15, 0
    %p110 = por %p108, %p109
    %p111 = scmp.le.s32.totalorder 1, %s9
    %p112 = scmp.lt.s32.totalorder %s9, 3
    %p113 = pnand %p111, %p112
    %p114 = pneg %p113
    // Predicated region
    $region9: #{gcn_forward.5} parent=5 // pred_check
      _
    $region10: #{gcn_forward.5} parent=5 // pred_check_branch
      %116 = sbr.rel (%p113) target = $region12
    $region11: #{gcn_forward.5} parent=5 // pred_region
      %s117 = ssub.s32 %s9, 1
      // Predicated region
      $region13: #{gcn_forward.5} parent=11 // pred_check
        %p118 = pneg %p56
      $region14: #{gcn_forward.5} parent=11 // pred_check_branch
        %120 = sbr.rel (%p118) target = $region16
      $region15: #{gcn_forward.5} parent=11 // pred_region
        _
      $region16: #{gcn_forward.5} parent=11 // pred_fallthru
        _
      // Predicated region
      $region17: #{gcn_forward.5} parent=11 // pred_check
        %p121 = pneg %p77
      $region18: #{gcn_forward.5} parent=11 // pred_check_branch
        %123 = sbr.rel (%p121) target = $region20
      $region19: #{gcn_forward.5} parent=11 // pred_region
        _
      $region20: #{gcn_forward.5} parent=11 // pred_fallthru
        _
    $region12: #{gcn_forward.5} parent=5 // pred_fallthru
      _
    %p124 = scmp.lt.s32.totalorder %s9, 2
    // Predicated region
    $region21: #{gcn_forward.5} parent=5 // pred_check
      %p125 = pneg %p124
    $region22: #{gcn_forward.5} parent=5 // pred_check_branch
      %127 = sbr.rel (%p125) target = $region24
    $region23: #{gcn_forward.5} parent=5 // pred_region
      // Predicated region
      $region25: #{gcn_forward.5} parent=23 // pred_check
        %p128 = pneg %p29
      $region26: #{gcn_forward.5} parent=23 // pred_check_branch
        %130 = sbr.rel (%p128) target = $region28
      $region27: #{gcn_forward.5} parent=23 // pred_region
        %s131 = smul.u32 16, %s9
        %p132 = scmp.lt.s32.totalorder %s131, 31
        %s133 = scalar_select %p132, %s131, 31
        %s134 = smul.addr %s133, 2
        %s135 = smul.addr %s134, 4
        %s136 = scalar_lea.vmem %s0, %s135
        %s137 = smul.u32 16, %s9
      $region28: #{gcn_forward.5} parent=23 // pred_fallthru
        _
    $region24: #{gcn_forward.5} parent=5 // pred_fallthru
      _
    %p138 = scmp.le.s32.totalorder 1, %s9
    %p139 = scmp.lt.s32.totalorder %s9, 3
    %p140 = pnand %p138, %p139
    %p141 = pneg %p140
    // Predicated region
    $region29: #{gcn_forward.5} parent=5 // pred_check
      _
    $region30: #{gcn_forward.5} parent=5 // pred_check_branch
      %143 = sbr.rel (%p140) target = $region32
    $region31: #{gcn_forward.5} parent=5 // pred_region
      %s144 = ssub.s32 %s9, 1
      %s145 = smul.u32 16, %s14
      %p146 = scmp.lt.s32.totalorder %s145, 31
      %s147 = scalar_select %p146, %s145, 31
      %s148 = smul.addr %s147, 2
      %s149 = smul.addr %s148, 4
      %s150 = scalar_lea.vmem %s0, %s149
      %p151 = pneg %p35
      %p152 = pneg %p32
      %p153 = pneg %p56
      %p154 = pneg %p53
      %p155 = pneg %p77
      %p156 = pneg %p74
      %p157 = pneg %p103
      %p158 = pneg %p100
      %s159 = smul.u32 16, %s14
      %p160 = scmp.lt.s32.totalorder %s159, 31
      %s161 = scalar_select %p160, %s159, 31
      %s162 = smul.addr %s161, 8
      %s163 = scalar_lea.vmem %s3, %s162
      %s164 = smul.u32 16, %s14
      %p165 = scmp.lt.s32.totalorder %s164, 31
      %s166 = scalar_select %p165, %s164, 31
      %s167 = smul.addr %s166, 2
      %s168 = smul.addr %s167, 4
      %s169 = scalar_lea.vmem %s0, %s168
      %s170 = smul.u32 16, %s14
      %s171 = smul.u32 16, %s14
      %p172 = scmp.lt.s32.totalorder %s171, 31
      %s173 = scalar_select %p172, %s171, 31
      %s174 = smul.addr %s173, 8
      %s175 = scalar_lea.vmem %s3, %s174
      %s176 = smul.u32 16, %s14
      %v178 = vld [vmem:[%s169] sm:$0xff]
      %v179 = vld [vmem:[%s169 + $0x8] sm:$0xff]
      %v180 = vld [vmem:[%s169 + $0x10] sm:$0xff]
      %v181 = vld [vmem:[%s169 + $0x18] sm:$0xff]
      %v182 = vld [vmem:[%s169 + $0x20] sm:$0xff]
      %v183 = vld [vmem:[%s169 + $0x28] sm:$0xff]
      %v184 = vld [vmem:[%s169 + $0x30] sm:$0xff]
      %v185 = vld [vmem:[%s169 + $0x38] sm:$0xff]
      %v186 = vld [vmem:[%s169 + $0x40] sm:$0xff]
      %v187 = vld [vmem:[%s169 + $0x48] sm:$0xff]
      %v188 = vld [vmem:[%s169 + $0x50] sm:$0xff]
      %v189 = vld [vmem:[%s169 + $0x58] sm:$0xff]
      %v190 = vld [vmem:[%s169 + $0x60] sm:$0xff]
      %v191 = vld [vmem:[%s169 + $0x68] sm:$0xff]
      %v192 = vld [vmem:[%s169 + $0x70] sm:$0xff]
      %v193 = vld [vmem:[%s169 + $0x78] sm:$0xff]
      %v194 = vld [vmem:[%s1] sm:$0xf]
      %v195 = vld [vmem:[%s1 + $0x4] sm:$0xf]
      %v196 = vld [vmem:[%s1 + $0x8] sm:$0xf]
      %v197 = vld [vmem:[%s1 + $0xc] sm:$0xf]
      %v198 = vld [vmem:[%s1 + $0x10] sm:$0xf]
      %v199 = vld [vmem:[%s1 + $0x14] sm:$0xf]
      %v200 = vld [vmem:[%s1 + $0x18] sm:$0xf]
      %v201 = vld [vmem:[%s1 + $0x1c] sm:$0xf]
      %v202 = vld [vmem:[%s1 + $0x20] sm:$0xf]
      %v203 = vld [vmem:[%s1 + $0x24] sm:$0xf]
      %v204 = vld [vmem:[%s1 + $0x28] sm:$0xf]
      %v205 = vld [vmem:[%s1 + $0x2c] sm:$0xf]
      %v206 = vld [vmem:[%s1 + $0x30] sm:$0xf]
      %v207 = vld [vmem:[%s1 + $0x34] sm:$0xf]
      %v208 = vld [vmem:[%s1 + $0x38] sm:$0xf]
      %v209 = vld [vmem:[%s1 + $0x3c] sm:$0xf]
      %v210 = vld [vmem:[%s1 + $0x40] sm:$0xf]
      %v211 = vld [vmem:[%s1 + $0x44] sm:$0xf]
      %v212 = vld [vmem:[%s1 + $0x48] sm:$0xf]
      %v213 = vld [vmem:[%s1 + $0x4c] sm:$0xf]
      %v214 = vld [vmem:[%s1 + $0x50] sm:$0xf]
      %v215 = vld [vmem:[%s1 + $0x54] sm:$0xf]
      %v216 = vld [vmem:[%s1 + $0x58] sm:$0xf]
      %v217 = vld [vmem:[%s1 + $0x5c] sm:$0xf]
      %v218 = vld [vmem:[%s1 + $0x60] sm:$0xf]
      %v219 = vld [vmem:[%s1 + $0x64] sm:$0xf]
      %v220 = vld [vmem:[%s1 + $0x68] sm:$0xf]
      %v221 = vld [vmem:[%s1 + $0x6c] sm:$0xf]
      %v222 = vld [vmem:[%s1 + $0x70] sm:$0xf]
      %v223 = vld [vmem:[%s1 + $0x74] sm:$0xf]
      %v224 = vld [vmem:[%s1 + $0x78] sm:$0xf]
      %v225 = vld [vmem:[%s1 + $0x7c] sm:$0xf]
      %v226 = vld [vmem:[%s2] sm:$0x1]
      %v228 = vlaneseq
      %v229 = vshrl.u32 %v228, 7
      %v230 = vsub.s32 0, %v229
      %v231 = vrot.slane %v226, %v230
      %v249 = vunpack.c.l.b16 %v178
      %v250 = vunpack.c.h.b16 %v178
      %v251 = vunpack.c.l.b16 %v179
      %v252 = vunpack.c.h.b16 %v179
      %v253 = vunpack.c.l.b16 %v180
      %v254 = vunpack.c.h.b16 %v180
      %v255 = vunpack.c.l.b16 %v181
      %v256 = vunpack.c.h.b16 %v181
      %v257 = vunpack.c.l.b16 %v182
      %v258 = vunpack.c.h.b16 %v182
      %v259 = vunpack.c.l.b16 %v183
      %v260 = vunpack.c.h.b16 %v183
      %v261 = vunpack.c.l.b16 %v184
      %v262 = vunpack.c.h.b16 %v184
      %v263 = vunpack.c.l.b16 %v185
      %v264 = vunpack.c.h.b16 %v185
      %v265 = vunpack.c.l.b16 %v186
      %v266 = vunpack.c.h.b16 %v186
      %v267 = vunpack.c.l.b16 %v187
      %v268 = vunpack.c.h.b16 %v187
      %v269 = vunpack.c.l.b16 %v188
      %v270 = vunpack.c.h.b16 %v188
      %v271 = vunpack.c.l.b16 %v189
      %v272 = vunpack.c.h.b16 %v189
      %v273 = vunpack.c.l.b16 %v190
      %v274 = vunpack.c.h.b16 %v190
      %v275 = vunpack.c.l.b16 %v191
      %v276 = vunpack.c.h.b16 %v191
      %v277 = vunpack.c.l.b16 %v192
      %v278 = vunpack.c.h.b16 %v192
      %v279 = vunpack.c.l.b16 %v193
      %v280 = vunpack.c.h.b16 %v193
      %v281 = vpack.c.b16 %v251, %v249
      %v282 = vpack.c.b16 %v252, %v250
      %v283 = vpack.c.b16 %v255, %v253
      %v284 = vpack.c.b16 %v256, %v254
      %v285 = vpack.c.b16 %v259, %v257
      %v286 = vpack.c.b16 %v260, %v258
      %v287 = vpack.c.b16 %v263, %v261
      %v288 = vpack.c.b16 %v264, %v262
      %v289 = vpack.c.b16 %v267, %v265
      %v290 = vpack.c.b16 %v268, %v266
      %v291 = vpack.c.b16 %v271, %v269
      %v292 = vpack.c.b16 %v272, %v270
      %v293 = vpack.c.b16 %v275, %v273
      %v294 = vpack.c.b16 %v276, %v274
      %v295 = vpack.c.b16 %v279, %v277
      %v296 = vpack.c.b16 %v280, %v278
      %v345 = vunpack.c.l.b16 %v194
      %v346 = vunpack.c.l.b16 %v195
      %v347 = vunpack.c.l.b16 %v196
      %v348 = vunpack.c.l.b16 %v197
      %v349 = vunpack.c.l.b16 %v198
      %v350 = vunpack.c.l.b16 %v199
      %v351 = vunpack.c.l.b16 %v200
      %v352 = vunpack.c.l.b16 %v201
      %v353 = vunpack.c.l.b16 %v202
      %v354 = vunpack.c.l.b16 %v203
      %v355 = vunpack.c.l.b16 %v204
      %v356 = vunpack.c.l.b16 %v205
      %v357 = vunpack.c.l.b16 %v206
      %v358 = vunpack.c.l.b16 %v207
      %v359 = vunpack.c.l.b16 %v208
      %v360 = vunpack.c.l.b16 %v209
      %v361 = vunpack.c.l.b16 %v210
      %v362 = vunpack.c.l.b16 %v211
      %v363 = vunpack.c.l.b16 %v212
      %v364 = vunpack.c.l.b16 %v213
      %v365 = vunpack.c.l.b16 %v214
      %v366 = vunpack.c.l.b16 %v215
      %v367 = vunpack.c.l.b16 %v216
      %v368 = vunpack.c.l.b16 %v217
      %v369 = vunpack.c.l.b16 %v218
      %v370 = vunpack.c.l.b16 %v219
      %v371 = vunpack.c.l.b16 %v220
      %v372 = vunpack.c.l.b16 %v221
      %v373 = vunpack.c.l.b16 %v222
      %v374 = vunpack.c.l.b16 %v223
      %v375 = vunpack.c.l.b16 %v224
      %v376 = vunpack.c.l.b16 %v225
      %v377 = vpack.c.b16 %v346, %v345
      %v378 = vpack.c.b16 %v348, %v347
      %v379 = vpack.c.b16 %v350, %v349
      %v380 = vpack.c.b16 %v352, %v351
      %v381 = vpack.c.b16 %v354, %v353
      %v382 = vpack.c.b16 %v356, %v355
      %v383 = vpack.c.b16 %v358, %v357
      %v384 = vpack.c.b16 %v360, %v359
      %v385 = vpack.c.b16 %v362, %v361
      %v386 = vpack.c.b16 %v364, %v363
      %v387 = vpack.c.b16 %v366, %v365
      %v388 = vpack.c.b16 %v368, %v367
      %v389 = vpack.c.b16 %v370, %v369
      %v390 = vpack.c.b16 %v372, %v371
      %v391 = vpack.c.b16 %v374, %v373
      %v392 = vpack.c.b16 %v376, %v375
      %409 = vmatprep.subr.bf16.mxu0 0
      %410 = vmatpush1.bf16.msra.mxu0 %v377
      %411 = vmatprep.subr.bf16.mxu0 0
      %412 = vmatpush1.bf16.msra.mxu0 %v378
      %413 = vmatprep.subr.bf16.mxu0 0
      %414 = vmatpush1.bf16.msra.mxu0 %v379
      %415 = vmatprep.subr.bf16.mxu0 0
      %416 = vmatpush1.bf16.msra.mxu0 %v380
      %417 = vmatprep.subr.bf16.mxu0 0
      %418 = vmatpush1.bf16.msra.mxu0 %v381
      %419 = vmatprep.subr.bf16.mxu0 0
      %420 = vmatpush1.bf16.msra.mxu0 %v382
      %421 = vmatprep.subr.bf16.mxu0 0
      %422 = vmatpush1.bf16.msra.mxu0 %v383
      %423 = vmatprep.subr.bf16.mxu0 0
      %424 = vmatpush1.bf16.msra.mxu0 %v384
      %425 = vmatprep.subr.bf16.mxu0 0
      %426 = vmatpush1.bf16.msra.mxu0 %v385
      %427 = vmatprep.subr.bf16.mxu0 0
      %428 = vmatpush1.bf16.msra.mxu0 %v386
      %429 = vmatprep.subr.bf16.mxu0 0
      %430 = vmatpush1.bf16.msra.mxu0 %v387
      %431 = vmatprep.subr.bf16.mxu0 0
      %432 = vmatpush1.bf16.msra.mxu0 %v388
      %433 = vmatprep.subr.bf16.mxu0 0
      %434 = vmatpush1.bf16.msra.mxu0 %v389
      %435 = vmatprep.subr.bf16.mxu0 0
      %436 = vmatpush1.bf16.msra.mxu0 %v390
      %437 = vmatprep.subr.bf16.mxu0 0
      %438 = vmatpush1.bf16.msra.mxu0 %v391
      %439 = vmatprep.subr.bf16.mxu0 0
      %440 = vmatpush1.bf16.msra.mxu0 %v392
      %441 = vmatprep.mubr.bf16.mxu0 %v282
      %442 = vmatmul.mubr.bf16.gmra.mrb[0].mxu0 %v281
      %v443 = vpop.f32.mrb[0].mxu0
      %v444 = vadd.f32 %v231, %v443
      %v445 = vpop.f32.mrb[0].mxu0
      %v446 = vpop.f32.mrb[0].mxu0
      %v447 = vadd.f32 %v231, %v446
      %v448 = vpop.f32.mrb[0].mxu0
      %449 = vmatprep.mubr.bf16.mxu0 %v284
      %450 = vmatmul.mubr.bf16.gmra.mrb[0].mxu0 %v283
      %v451 = vpop.f32.mrb[0].mxu0
      %v452 = vadd.f32 %v231, %v451
      %v453 = vpop.f32.mrb[0].mxu0
      %v454 = vpop.f32.mrb[0].mxu0
      %v455 = vadd.f32 %v231, %v454
      %v456 = vpop.f32.mrb[0].mxu0
      %457 = vmatprep.mubr.bf16.mxu0 %v286
      %458 = vmatmul.mubr.bf16.gmra.mrb[0].mxu0 %v285
      %v459 = vpop.f32.mrb[0].mxu0
      %v460 = vadd.f32 %v231, %v459
      %v461 = vpop.f32.mrb[0].mxu0
      %v462 = vpop.f32.mrb[0].mxu0
      %v463 = vadd.f32 %v231, %v462
      %v464 = vpop.f32.mrb[0].mxu0
      %465 = vmatprep.mubr.bf16.mxu0 %v288
      %466 = vmatmul.mubr.bf16.gmra.mrb[0].mxu0 %v287
      %v467 = vpop.f32.mrb[0].mxu0
      %v468 = vadd.f32 %v231, %v467
      %v469 = vpop.f32.mrb[0].mxu0
      %v470 = vpop.f32.mrb[0].mxu0
      %v471 = vadd.f32 %v231, %v470
      %v472 = vpop.f32.mrb[0].mxu0
      %473 = vmatprep.mubr.bf16.mxu0 %v290
      %474 = vmatmul.mubr.bf16.gmra.mrb[0].mxu0 %v289
      %v475 = vpop.f32.mrb[0].mxu0
      %v476 = vadd.f32 %v231, %v475
      %v477 = vpop.f32.mrb[0].mxu0
      %v478 = vpop.f32.mrb[0].mxu0
      %v479 = vadd.f32 %v231, %v478
      %v480 = vpop.f32.mrb[0].mxu0
      %481 = vmatprep.mubr.bf16.mxu0 %v292
      %482 = vmatmul.mubr.bf16.gmra.mrb[0].mxu0 %v291
      %v483 = vpop.f32.mrb[0].mxu0
      %v484 = vadd.f32 %v231, %v483
      %v485 = vpop.f32.mrb[0].mxu0
      %v486 = vpop.f32.mrb[0].mxu0
      %v487 = vadd.f32 %v231, %v486
      %v488 = vpop.f32.mrb[0].mxu0
      %489 = vmatprep.mubr.bf16.mxu0 %v294
      %490 = vmatmul.mubr.bf16.gmra.mrb[0].mxu0 %v293
      %v491 = vpop.f32.mrb[0].mxu0
      %v492 = vadd.f32 %v231, %v491
      %v493 = vpop.f32.mrb[0].mxu0
      %v494 = vpop.f32.mrb[0].mxu0
      %v495 = vadd.f32 %v231, %v494
      %v496 = vpop.f32.mrb[0].mxu0
      %497 = vmatprep.mubr.bf16.mxu0 %v296
      %498 = vmatmul.mubr.bf16.gmra.mrb[0].mxu0 %v295
      %v499 = vpop.f32.mrb[0].mxu0
      %v500 = vadd.f32 %v231, %v499
      %v501 = vpop.f32.mrb[0].mxu0
      %v502 = vpop.f32.mrb[0].mxu0
      %v503 = vadd.f32 %v231, %v502
      %v504 = vpop.f32.mrb[0].mxu0
      %505 = vdwg.mxu0
      %506 = vmax.xlane.f32.xlu0 %v444
      %v507 = vpop.xlane.xlu0 %506
      %508 = vmax.xlane.f32.xlu0 %v447
      %v509 = vpop.xlane.xlu0 %508
      %510 = vmax.xlane.f32.xlu0 %v452
      %v511 = vpop.xlane.xlu0 %510
      %512 = vmax.xlane.f32.xlu0 %v455
      %v513 = vpop.xlane.xlu0 %512
      %514 = vmax.xlane.f32.xlu0 %v460
      %v515 = vpop.xlane.xlu0 %514
      %516 = vmax.xlane.f32.xlu0 %v463
      %v517 = vpop.xlane.xlu0 %516
      %518 = vmax.xlane.f32.xlu0 %v468
      %v519 = vpop.xlane.xlu0 %518
      %520 = vmax.xlane.f32.xlu0 %v471
      %v521 = vpop.xlane.xlu0 %520
      %522 = vmax.xlane.f32.xlu0 %v476
      %v523 = vpop.xlane.xlu0 %522
      %524 = vmax.xlane.f32.xlu0 %v479
      %v525 = vpop.xlane.xlu0 %524
      %526 = vmax.xlane.f32.xlu0 %v484
      %v527 = vpop.xlane.xlu0 %526
      %528 = vmax.xlane.f32.xlu0 %v487
      %v529 = vpop.xlane.xlu0 %528
      %530 = vmax.xlane.f32.xlu0 %v492
      %v531 = vpop.xlane.xlu0 %530
      %532 = vmax.xlane.f32.xlu0 %v495
      %v533 = vpop.xlane.xlu0 %532
      %534 = vmax.xlane.f32.xlu0 %v500
      %v535 = vpop.xlane.xlu0 %534
      %536 = vmax.xlane.f32.xlu0 %v503
      %v537 = vpop.xlane.xlu0 %536
      %v538 = vsub.f32 %v444, %v507
      %v539 = vsub.f32 %v447, %v509
      %v540 = vsub.f32 %v452, %v511
      %v541 = vsub.f32 %v455, %v513
      %v542 = vsub.f32 %v460, %v515
      %v543 = vsub.f32 %v463, %v517
      %v544 = vsub.f32 %v468, %v519
      %v545 = vsub.f32 %v471, %v521
      %v546 = vsub.f32 %v476, %v523
      %v547 = vsub.f32 %v479, %v525
      %v548 = vsub.f32 %v484, %v527
      %v549 = vsub.f32 %v487, %v529
      %v550 = vsub.f32 %v492, %v531
      %v551 = vsub.f32 %v495, %v533
      %v552 = vsub.f32 %v500, %v535
      %v553 = vsub.f32 %v503, %v537
      %v554 = vmul.f32 %v538, 1.442695
      %v555 = vpow.pop %v554
      %v556 = vmul.f32 %v539, 1.442695
      %v557 = vpow.pop %v556
      %v558 = vmul.f32 %v540, 1.442695
      %v559 = vpow.pop %v558
      %v560 = vmul.f32 %v541, 1.442695
      %v561 = vpow.pop %v560
      %v562 = vmul.f32 %v542, 1.442695
      %v563 = vpow.pop %v562
      %v564 = vmul.f32 %v543, 1.442695
      %v565 = vpow.pop %v564
      %v566 = vmul.f32 %v544, 1.442695
      %v567 = vpow.pop %v566
      %v568 = vmul.f32 %v545, 1.442695
      %v569 = vpow.pop %v568
      %v570 = vmul.f32 %v546, 1.442695
      %v571 = vpow.pop %v570
      %v572 = vmul.f32 %v547, 1.442695
      %v573 = vpow.pop %v572
      %v574 = vmul.f32 %v548, 1.442695
      %v575 = vpow.pop %v574
      %v576 = vmul.f32 %v549, 1.442695
      %v577 = vpow.pop %v576
      %v578 = vmul.f32 %v550, 1.442695
      %v579 = vpow.pop %v578
      %v580 = vmul.f32 %v551, 1.442695
      %v581 = vpow.pop %v580
      %v582 = vmul.f32 %v552, 1.442695
      %v583 = vpow.pop %v582
      %v584 = vmul.f32 %v553, 1.442695
      %v585 = vpow.pop %v584
      %586 = vadd.xlane.f32.xlu0 %v555
      %v587 = vpop.xlane.xlu0 %586
      %588 = vadd.xlane.f32.xlu0 %v557
      %v589 = vpop.xlane.xlu0 %588
      %590 = vadd.xlane.f32.xlu0 %v559
      %v591 = vpop.xlane.xlu0 %590
      %592 = vadd.xlane.f32.xlu0 %v561
      %v593 = vpop.xlane.xlu0 %592
      %594 = vadd.xlane.f32.xlu0 %v563
      %v595 = vpop.xlane.xlu0 %594
      %596 = vadd.xlane.f32.xlu0 %v565
      %v597 = vpop.xlane.xlu0 %596
      %598 = vadd.xlane.f32.xlu0 %v567
      %v599 = vpop.xlane.xlu0 %598
      %600 = vadd.xlane.f32.xlu0 %v569
      %v601 = vpop.xlane.xlu0 %600
      %602 = vadd.xlane.f32.xlu0 %v571
      %v603 = vpop.xlane.xlu0 %602
      %604 = vadd.xlane.f32.xlu0 %v573
      %v605 = vpop.xlane.xlu0 %604
      %606 = vadd.xlane.f32.xlu0 %v575
      %v607 = vpop.xlane.xlu0 %606
      %608 = vadd.xlane.f32.xlu0 %v577
      %v609 = vpop.xlane.xlu0 %608
      %610 = vadd.xlane.f32.xlu0 %v579
      %v611 = vpop.xlane.xlu0 %610
      %612 = vadd.xlane.f32.xlu0 %v581
      %v613 = vpop.xlane.xlu0 %612
      %614 = vadd.xlane.f32.xlu0 %v583
      %v615 = vpop.xlane.xlu0 %614
      %616 = vadd.xlane.f32.xlu0 %v585
      %v617 = vpop.xlane.xlu0 %616
      %v618 = vlog2.pop %v587
      %v619 = vmul.f32 %v618, 0.6931472
      %v620 = vlog2.pop %v589
      %v621 = vmul.f32 %v620, 0.6931472
      %v622 = vlog2.pop %v591
      %v623 = vmul.f32 %v622, 0.6931472
      %v624 = vlog2.pop %v593
      %v625 = vmul.f32 %v624, 0.6931472
      %v626 = vlog2.pop %v595
      %v627 = vmul.f32 %v626, 0.6931472
      %v628 = vlog2.pop %v597
      %v629 = vmul.f32 %v628, 0.6931472
      %v630 = vlog2.pop %v599
      %v631 = vmul.f32 %v630, 0.6931472
      %v632 = vlog2.pop %v601
      %v633 = vmul.f32 %v632, 0.6931472
      %v634 = vlog2.pop %v603
      %v635 = vmul.f32 %v634, 0.6931472
      %v636 = vlog2.pop %v605
      %v637 = vmul.f32 %v636, 0.6931472
      %v638 = vlog2.pop %v607
      %v639 = vmul.f32 %v638, 0.6931472
      %v640 = vlog2.pop %v609
      %v641 = vmul.f32 %v640, 0.6931472
      %v642 = vlog2.pop %v611
      %v643 = vmul.f32 %v642, 0.6931472
      %v644 = vlog2.pop %v613
      %v645 = vmul.f32 %v644, 0.6931472
      %v646 = vlog2.pop %v615
      %v647 = vmul.f32 %v646, 0.6931472
      %v648 = vlog2.pop %v617
      %v649 = vmul.f32 %v648, 0.6931472
      %v650 = vsub.f32 %v538, %v619
      %v651 = vsub.f32 %v539, %v621
      %v652 = vsub.f32 %v540, %v623
      %v653 = vsub.f32 %v541, %v625
      %v654 = vsub.f32 %v542, %v627
      %v655 = vsub.f32 %v543, %v629
      %v656 = vsub.f32 %v544, %v631
      %v657 = vsub.f32 %v545, %v633
      %v658 = vsub.f32 %v546, %v635
      %v659 = vsub.f32 %v547, %v637
      %v660 = vsub.f32 %v548, %v639
      %v661 = vsub.f32 %v549, %v641
      %v662 = vsub.f32 %v550, %v643
      %v663 = vsub.f32 %v551, %v645
      %v664 = vsub.f32 %v552, %v647
      %v665 = vsub.f32 %v553, %v649
      %666 = vst [vmem:[%s175] sm:$0xff] %v650
      %667 = vst [vmem:[%s175 + $0x8] sm:$0xff] %v651
      %668 = vst [vmem:[%s175 + $0x10] sm:$0xff] %v652
      %669 = vst [vmem:[%s175 + $0x18] sm:$0xff] %v653
      %670 = vst [vmem:[%s175 + $0x20] sm:$0xff] %v654
      %671 = vst [vmem:[%s175 + $0x28] sm:$0xff] %v655
      %672 = vst [vmem:[%s175 + $0x30] sm:$0xff] %v656
      %673 = vst [vmem:[%s175 + $0x38] sm:$0xff] %v657
      %674 = vst [vmem:[%s175 + $0x40] sm:$0xff] %v658
      %675 = vst [vmem:[%s175 + $0x48] sm:$0xff] %v659
      %676 = vst [vmem:[%s175 + $0x50] sm:$0xff] %v660
      %677 = vst [vmem:[%s175 + $0x58] sm:$0xff] %v661
      %678 = vst [vmem:[%s175 + $0x60] sm:$0xff] %v662
      %679 = vst [vmem:[%s175 + $0x68] sm:$0xff] %v663
      %680 = vst [vmem:[%s175 + $0x70] sm:$0xff] %v664
      %681 = vst [vmem:[%s175 + $0x78] sm:$0xff] %v665
      %s682 = smul.u32 16, %s14
      %p683 = scmp.lt.s32.totalorder %s682, 31
      %s684 = scalar_select %p683, %s682, 31
      %s685 = smul.addr %s684, 8
      %s686 = scalar_lea.vmem %s3, %s685
      // Predicated region
      $region33: #{gcn_forward.5} parent=31 // pred_check
        %p687 = pneg %p100
      $region34: #{gcn_forward.5} parent=31 // pred_check_branch
        %689 = sbr.rel (%p687) target = $region36
      $region35: #{gcn_forward.5} parent=31 // pred_region
        %s690 = smul.u32 16, %s14
      $region36: #{gcn_forward.5} parent=31 // pred_fallthru
        _
    $region32: #{gcn_forward.5} parent=5 // pred_fallthru
      _
    %p691 = scmp.le.s32.totalorder 2, %s9
    // Predicated region
    $region37: #{gcn_forward.5} parent=5 // pred_check
      %p692 = pneg %p691
    $region38: #{gcn_forward.5} parent=5 // pred_check_branch
      %694 = sbr.rel (%p692) target = $region40
    $region39: #{gcn_forward.5} parent=5 // pred_region
      %s695 = ssub.s32 %s9, 2
      // Predicated region
      $region41: #{gcn_forward.5} parent=39 // pred_check
        %p696 = pneg %p106
      $region42: #{gcn_forward.5} parent=39 // pred_check_branch
        %698 = sbr.rel (%p696) target = $region44
      $region43: #{gcn_forward.5} parent=39 // pred_region
        %s699 = smul.u32 16, %s15
        %p700 = scmp.lt.s32.totalorder %s699, 31
        %s701 = scalar_select %p700, %s699, 31
        %s702 = smul.addr %s701, 8
        %s703 = scalar_lea.vmem %s3, %s702
      $region44: #{gcn_forward.5} parent=39 // pred_fallthru
        _
    $region40: #{gcn_forward.5} parent=5 // pred_fallthru
      _
  $region6: #{gcn_forward.5} parent=0 // loop_footer
    %s13 = sadd.s32 1, %s9
  $region7: #{gcn_forward.5} parent=0 // loop_footer_branch
    %8 = sbr.rel target = $region3
  $region8: #{gcn_forward.5} parent=0 // loop_exit
    _

// kernel: gcn_forward.4
$region0: #{gcn_forward.4}
  #allocation0 [shape = 'u32[]', space=smem, size = 0x4, offset = 0x4, fixed_abs, tag = 'smem constant byte address 0x4 - core index']
  #allocation1 [shape = 'u32[144,128]{1,0:T(1,128)}', space=vmem, size = 0x12000, scoped, tag = 'internal scratch']
  %s0 = inlined_call_operand.vmem [shape: bf16[256,256], index: 0, kind: input, shape index: {}]
  %s1 = inlined_call_operand.vmem [shape: bf16[256,128], index: 1, kind: input, shape index: {}]
  %s2 = inlined_call_operand.vmem [shape: f32[1,128], index: 2, kind: input, shape index: {}]
  %s3 = inlined_call_operand.vmem [shape: bf16[128,128], index: 3, kind: input, shape index: {}]
  %s4 = inlined_call_operand.vmem [shape: bf16[256,128], index: 4, kind: output, shape index: {}]
  %s5 = sld [smem:[#allocation0]]
  $region49: #{gcn_forward.4} parent=0
    _
  %s7 = ssub.s32 1, %s5
  %s8 = scalar_select 0, %s7, %s5
  loop: start=0, step=1, limit=4
  $region2: #{gcn_forward.4} parent=0 // loop_pre_header
    _
  $region3: #{gcn_forward.4} parent=0 // loop_header
    %s10 = sphi 0, %s14
    %p11 = scmp.ge.s32.totalorder %s10, 4
    %s20 = sphi 0, %s22
    %s23 = sphi 0, %s20
    %s24 = sphi 0, %s23
    %s40 = sphi 0, %s24
    %s44 = sphi 0, %s44
    %s46 = sphi 0, %s44
    %s47 = sphi 0, %s46
    %s61 = sphi 0, %s47
    %s65 = sphi 0, %s65
    %s67 = sphi 0, %s65
    %s68 = sphi 0, %s67
    %s82 = sphi 0, %s68
    %s86 = sphi 0, %s86
    %s88 = sphi 0, %s86
    %s89 = sphi 0, %s88
    %s103 = sphi 0, %s89
    %s109 = sphi 0, %s111
    %s112 = sphi 0, %s109
    %s113 = sphi 0, %s112
    %s129 = sphi 0, %s113
  $region4: #{gcn_forward.4} parent=0 // loop_header_branch
    %13 = sbr.rel (%p11) target = $region8
  $region5: #{gcn_forward.4} parent=0 // loop_body
    %s15 = ssub.s32 %s10, 1
    %s16 = ssub.s32 %s10, 2
    %s17 = sadd.s32 %s10, 1
    %s18 = ssub.s32 %s10, %s17
    %p19 = scmp.eq.s32.totalorder %s18, 0
    %s21 = sadd.s32 %s20, 1
    %s22 = scalar_select %p19, %s20, %s21
    %p25 = pneg %p19
    %p26 = scmp.eq.s32.totalorder %s10, 1
    %p27 = por %p25, %p26
    %p28 = scmp.ne.s32.totalorder %s20, %s23
    %p29 = scmp.eq.s32.totalorder %s10, 0
    %p30 = por %p28, %p29
    %p31 = scmp.ne.s32.totalorder %s20, %s23
    %p32 = scmp.eq.s32.totalorder %s15, 1
    %p33 = por %p31, %p32
    %p34 = scmp.ne.s32.totalorder %s23, %s24
    %p35 = scmp.eq.s32.totalorder %s15, 0
    %p36 = por %p34, %p35
    %p37 = scmp.ne.s32.totalorder %s23, %s24
    %p38 = scmp.eq.s32.totalorder %s16, 1
    %p39 = por %p37, %p38
    %p41 = scmp.ne.s32.totalorder %s24, %s40
    %p42 = scmp.eq.s32.totalorder %s16, 0
    %p43 = por %p41, %p42
    %s45 = sadd.s32 %s44, 1
    %p48 = scmp.eq.s32.totalorder %s10, 1
    %p49 = scmp.ne.s32.totalorder %s44, %s46
    %p50 = scmp.eq.s32.totalorder %s10, 0
    %p51 = por %p49, %p50
    %p52 = scmp.ne.s32.totalorder %s44, %s46
    %p53 = scmp.eq.s32.totalorder %s15, 1
    %p54 = por %p52, %p53
    %p55 = scmp.ne.s32.totalorder %s46, %s47
    %p56 = scmp.eq.s32.totalorder %s15, 0
    %p57 = por %p55, %p56
    %p58 = scmp.ne.s32.totalorder %s46, %s47
    %p59 = scmp.eq.s32.totalorder %s16, 1
    %p60 = por %p58, %p59
    %p62 = scmp.ne.s32.totalorder %s47, %s61
    %p63 = scmp.eq.s32.totalorder %s16, 0
    %p64 = por %p62, %p63
    %s66 = sadd.s32 %s65, 1
    %p69 = scmp.eq.s32.totalorder %s10, 1
    %p70 = scmp.ne.s32.totalorder %s65, %s67
    %p71 = scmp.eq.s32.totalorder %s10, 0
    %p72 = por %p70, %p71
    %p73 = scmp.ne.s32.totalorder %s65, %s67
    %p74 = scmp.eq.s32.totalorder %s15, 1
    %p75 = por %p73, %p74
    %p76 = scmp.ne.s32.totalorder %s67, %s68
    %p77 = scmp.eq.s32.totalorder %s15, 0
    %p78 = por %p76, %p77
    %p79 = scmp.ne.s32.totalorder %s67, %s68
    %p80 = scmp.eq.s32.totalorder %s16, 1
    %p81 = por %p79, %p80
    %p83 = scmp.ne.s32.totalorder %s68, %s82
    %p84 = scmp.eq.s32.totalorder %s16, 0
    %p85 = por %p83, %p84
    %s87 = sadd.s32 %s86, 1
    %p90 = scmp.eq.s32.totalorder %s10, 1
    %p91 = scmp.ne.s32.totalorder %s86, %s88
    %p92 = scmp.eq.s32.totalorder %s10, 0
    %p93 = por %p91, %p92
    %p94 = scmp.ne.s32.totalorder %s86, %s88
    %p95 = scmp.eq.s32.totalorder %s15, 1
    %p96 = por %p94, %p95
    %p97 = scmp.ne.s32.totalorder %s88, %s89
    %p98 = scmp.eq.s32.totalorder %s15, 0
    %p99 = por %p97, %p98
    %p100 = scmp.ne.s32.totalorder %s88, %s89
    %p101 = scmp.eq.s32.totalorder %s16, 1
    %p102 = por %p100, %p101
    %p104 = scmp.ne.s32.totalorder %s89, %s103
    %p105 = scmp.eq.s32.totalorder %s16, 0
    %p106 = por %p104, %p105
    %s107 = ssub.s32 %s10, %s17
    %p108 = scmp.eq.s32.totalorder %s107, 0
    %s110 = sadd.s32 %s109, 1
    %s111 = scalar_select %p108, %s109, %s110
    %p114 = pneg %p108
    %p115 = scmp.eq.s32.totalorder %s10, 1
    %p116 = por %p114, %p115
    %p117 = scmp.ne.s32.totalorder %s109, %s112
    %p118 = scmp.eq.s32.totalorder %s10, 0
    %p119 = por %p117, %p118
    %p120 = scmp.ne.s32.totalorder %s109, %s112
    %p121 = scmp.eq.s32.totalorder %s15, 1
    %p122 = por %p120, %p121
    %p123 = scmp.ne.s32.totalorder %s112, %s113
    %p124 = scmp.eq.s32.totalorder %s15, 0
    %p125 = por %p123, %p124
    %p126 = scmp.ne.s32.totalorder %s112, %s113
    %p127 = scmp.eq.s32.totalorder %s16, 1
    %p128 = por %p126, %p127
    %p130 = scmp.ne.s32.totalorder %s113, %s129
    %p131 = scmp.eq.s32.totalorder %s16, 0
    %p132 = por %p130, %p131
    %p133 = scmp.le.s32.totalorder 1, %s10
    %p134 = scmp.lt.s32.totalorder %s10, 3
    %p135 = pnand %p133, %p134
    %p136 = pneg %p135
    // Predicated region
    $region9: #{gcn_forward.4} parent=5 // pred_check
      _
    $region10: #{gcn_forward.4} parent=5 // pred_check_branch
      %138 = sbr.rel (%p135) target = $region12
    $region11: #{gcn_forward.4} parent=5 // pred_region
      %s139 = ssub.s32 %s10, 1
      // Predicated region
      $region13: #{gcn_forward.4} parent=11 // pred_check
        %p140 = pneg %p57
      $region14: #{gcn_forward.4} parent=11 // pred_check_branch
        %142 = sbr.rel (%p140) target = $region16
      $region15: #{gcn_forward.4} parent=11 // pred_region
        _
      $region16: #{gcn_forward.4} parent=11 // pred_fallthru
        _
      // Predicated region
      $region17: #{gcn_forward.4} parent=11 // pred_check
        %p143 = pneg %p78
      $region18: #{gcn_forward.4} parent=11 // pred_check_branch
        %145 = sbr.rel (%p143) target = $region20
      $region19: #{gcn_forward.4} parent=11 // pred_region
        _
      $region20: #{gcn_forward.4} parent=11 // pred_fallthru
        _
      // Predicated region
      $region21: #{gcn_forward.4} parent=11 // pred_check
        %p146 = pneg %p99
      $region22: #{gcn_forward.4} parent=11 // pred_check_branch
        %148 = sbr.rel (%p146) target = $region24
      $region23: #{gcn_forward.4} parent=11 // pred_region
        _
      $region24: #{gcn_forward.4} parent=11 // pred_fallthru
        _
    $region12: #{gcn_forward.4} parent=5 // pred_fallthru
      _
    %p149 = scmp.lt.s32.totalorder %s10, 2
    // Predicated region
    $region25: #{gcn_forward.4} parent=5 // pred_check
      %p150 = pneg %p149
    $region26: #{gcn_forward.4} parent=5 // pred_check_branch
      %152 = sbr.rel (%p150) target = $region28
    $region27: #{gcn_forward.4} parent=5 // pred_region
      // Predicated region
      $region29: #{gcn_forward.4} parent=27 // pred_check
        %p153 = pneg %p30
      $region30: #{gcn_forward.4} parent=27 // pred_check_branch
        %155 = sbr.rel (%p153) target = $region32
      $region31: #{gcn_forward.4} parent=27 // pred_region
        %s156 = smul.u32 16, %s10
        %p157 = scmp.lt.s32.totalorder %s156, 31
        %s158 = scalar_select %p157, %s156, 31
        %s159 = smul.addr %s158, 2
        %s160 = smul.addr %s159, 4
        %s161 = scalar_lea.vmem %s0, %s160
        %s162 = smul.u32 16, %s10
      $region32: #{gcn_forward.4} parent=27 // pred_fallthru
        _
    $region28: #{gcn_forward.4} parent=5 // pred_fallthru
      _
    %p163 = scmp.le.s32.totalorder 1, %s10
    %p164 = scmp.lt.s32.totalorder %s10, 3
    %p165 = pnand %p163, %p164
    %p166 = pneg %p165
    // Predicated region
    $region33: #{gcn_forward.4} parent=5 // pred_check
      _
    $region34: #{gcn_forward.4} parent=5 // pred_check_branch
      %168 = sbr.rel (%p165) target = $region36
    $region35: #{gcn_forward.4} parent=5 // pred_region
      %s169 = ssub.s32 %s10, 1
      %s170 = smul.u32 16, %s15
      %p171 = scmp.lt.s32.totalorder %s170, 31
      %s172 = scalar_select %p171, %s170, 31
      %s173 = smul.addr %s172, 2
      %s174 = smul.addr %s173, 4
      %s175 = scalar_lea.vmem %s0, %s174
      %p176 = pneg %p36
      %p177 = pneg %p33
      %p178 = pneg %p57
      %p179 = pneg %p54
      %p180 = pneg %p78
      %p181 = pneg %p75
      %p182 = pneg %p99
      %p183 = pneg %p96
      %p184 = pneg %p125
      %p185 = pneg %p122
      %s186 = smul.u32 16, %s15
      %p187 = scmp.lt.s32.totalorder %s186, 31
      %s188 = scalar_select %p187, %s186, 31
      %s189 = smul.addr %s188, 4
      %s190 = scalar_lea.vmem %s4, %s189
      %s191 = smul.u32 16, %s15
      %p192 = scmp.lt.s32.totalorder %s191, 31
      %s193 = scalar_select %p192, %s191, 31
      %s194 = smul.addr %s193, 2
      %s195 = smul.addr %s194, 4
      %s196 = scalar_lea.vmem %s0, %s195
      %s197 = smul.u32 16, %s15
      %s198 = smul.u32 16, %s15
      %p199 = scmp.lt.s32.totalorder %s198, 31
      %s200 = scalar_select %p199, %s198, 31
      %s201 = smul.addr %s200, 4
      %s202 = scalar_lea.vmem %s4, %s201
      %s203 = smul.u32 16, %s15
      %v205 = vld [vmem:[%s196] sm:$0xff]
      %v206 = vld [vmem:[%s196 + $0x8] sm:$0xff]
      %v207 = vld [vmem:[%s196 + $0x10] sm:$0xff]
      %v208 = vld [vmem:[%s196 + $0x18] sm:$0xff]
      %v209 = vld [vmem:[%s196 + $0x20] sm:$0xff]
      %v210 = vld [vmem:[%s196 + $0x28] sm:$0xff]
      %v211 = vld [vmem:[%s196 + $0x30] sm:$0xff]
      %v212 = vld [vmem:[%s196 + $0x38] sm:$0xff]
      %v213 = vld [vmem:[%s196 + $0x40] sm:$0xff]
      %v214 = vld [vmem:[%s196 + $0x48] sm:$0xff]
      %v215 = vld [vmem:[%s196 + $0x50] sm:$0xff]
      %v216 = vld [vmem:[%s196 + $0x58] sm:$0xff]
      %v217 = vld [vmem:[%s196 + $0x60] sm:$0xff]
      %v218 = vld [vmem:[%s196 + $0x68] sm:$0xff]
      %v219 = vld [vmem:[%s196 + $0x70] sm:$0xff]
      %v220 = vld [vmem:[%s196 + $0x78] sm:$0xff]
      %v221 = vld [vmem:[%s1] sm:$0xf]
      %v222 = vld [vmem:[%s1 + $0x4] sm:$0xf]
      %v223 = vld [vmem:[%s1 + $0x8] sm:$0xf]
      %v224 = vld [vmem:[%s1 + $0xc] sm:$0xf]
      %v225 = vld [vmem:[%s1 + $0x10] sm:$0xf]
      %v226 = vld [vmem:[%s1 + $0x14] sm:$0xf]
      %v227 = vld [vmem:[%s1 + $0x18] sm:$0xf]
      %v228 = vld [vmem:[%s1 + $0x1c] sm:$0xf]
      %v229 = vld [vmem:[%s1 + $0x20] sm:$0xf]
      %v230 = vld [vmem:[%s1 + $0x24] sm:$0xf]
      %v231 = vld [vmem:[%s1 + $0x28] sm:$0xf]
      %v232 = vld [vmem:[%s1 + $0x2c] sm:$0xf]
      %v233 = vld [vmem:[%s1 + $0x30] sm:$0xf]
      %v234 = vld [vmem:[%s1 + $0x34] sm:$0xf]
      %v235 = vld [vmem:[%s1 + $0x38] sm:$0xf]
      %v236 = vld [vmem:[%s1 + $0x3c] sm:$0xf]
      %v237 = vld [vmem:[%s1 + $0x40] sm:$0xf]
      %v238 = vld [vmem:[%s1 + $0x44] sm:$0xf]
      %v239 = vld [vmem:[%s1 + $0x48] sm:$0xf]
      %v240 = vld [vmem:[%s1 + $0x4c] sm:$0xf]
      %v241 = vld [vmem:[%s1 + $0x50] sm:$0xf]
      %v242 = vld [vmem:[%s1 + $0x54] sm:$0xf]
      %v243 = vld [vmem:[%s1 + $0x58] sm:$0xf]
      %v244 = vld [vmem:[%s1 + $0x5c] sm:$0xf]
      %v245 = vld [vmem:[%s1 + $0x60] sm:$0xf]
      %v246 = vld [vmem:[%s1 + $0x64] sm:$0xf]
      %v247 = vld [vmem:[%s1 + $0x68] sm:$0xf]
      %v248 = vld [vmem:[%s1 + $0x6c] sm:$0xf]
      %v249 = vld [vmem:[%s1 + $0x70] sm:$0xf]
      %v250 = vld [vmem:[%s1 + $0x74] sm:$0xf]
      %v251 = vld [vmem:[%s1 + $0x78] sm:$0xf]
      %v252 = vld [vmem:[%s1 + $0x7c] sm:$0xf]
      %v253 = vld [vmem:[%s2] sm:$0x1]
      %v255 = vlaneseq
      %v256 = vshrl.u32 %v255, 7
      %v257 = vsub.s32 0, %v256
      %v258 = vrot.slane %v253, %v257
      %v276 = vunpack.c.l.b16 %v205
      %v277 = vunpack.c.h.b16 %v205
      %v278 = vunpack.c.l.b16 %v206
      %v279 = vunpack.c.h.b16 %v206
      %v280 = vunpack.c.l.b16 %v207
      %v281 = vunpack.c.h.b16 %v207
      %v282 = vunpack.c.l.b16 %v208
      %v283 = vunpack.c.h.b16 %v208
      %v284 = vunpack.c.l.b16 %v209
      %v285 = vunpack.c.h.b16 %v209
      %v286 = vunpack.c.l.b16 %v210
      %v287 = vunpack.c.h.b16 %v210
      %v288 = vunpack.c.l.b16 %v211
      %v289 = vunpack.c.h.b16 %v211
      %v290 = vunpack.c.l.b16 %v212
      %v291 = vunpack.c.h.b16 %v212
      %v292 = vunpack.c.l.b16 %v213
      %v293 = vunpack.c.h.b16 %v213
      %v294 = vunpack.c.l.b16 %v214
      %v295 = vunpack.c.h.b16 %v214
      %v296 = vunpack.c.l.b16 %v215
      %v297 = vunpack.c.h.b16 %v215
      %v298 = vunpack.c.l.b16 %v216
      %v299 = vunpack.c.h.b16 %v216
      %v300 = vunpack.c.l.b16 %v217
      %v301 = vunpack.c.h.b16 %v217
      %v302 = vunpack.c.l.b16 %v218
      %v303 = vunpack.c.h.b16 %v218
      %v304 = vunpack.c.l.b16 %v219
      %v305 = vunpack.c.h.b16 %v219
      %v306 = vunpack.c.l.b16 %v220
      %v307 = vunpack.c.h.b16 %v220
      %v308 = vpack.c.b16 %v278, %v276
      %v309 = vpack.c.b16 %v279, %v277
      %v310 = vpack.c.b16 %v282, %v280
      %v311 = vpack.c.b16 %v283, %v281
      %v312 = vpack.c.b16 %v286, %v284
      %v313 = vpack.c.b16 %v287, %v285
      %v314 = vpack.c.b16 %v290, %v288
      %v315 = vpack.c.b16 %v291, %v289
      %v316 = vpack.c.b16 %v294, %v292
      %v317 = vpack.c.b16 %v295, %v293
      %v318 = vpack.c.b16 %v298, %v296
      %v319 = vpack.c.b16 %v299, %v297
      %v320 = vpack.c.b16 %v302, %v300
      %v321 = vpack.c.b16 %v303, %v301
      %v322 = vpack.c.b16 %v306, %v304
      %v323 = vpack.c.b16 %v307, %v305
      %v372 = vunpack.c.l.b16 %v221
      %v373 = vunpack.c.l.b16 %v222
      %v374 = vunpack.c.l.b16 %v223
      %v375 = vunpack.c.l.b16 %v224
      %v376 = vunpack.c.l.b16 %v225
      %v377 = vunpack.c.l.b16 %v226
      %v378 = vunpack.c.l.b16 %v227
      %v379 = vunpack.c.l.b16 %v228
      %v380 = vunpack.c.l.b16 %v229
      %v381 = vunpack.c.l.b16 %v230
      %v382 = vunpack.c.l.b16 %v231
      %v383 = vunpack.c.l.b16 %v232
      %v384 = vunpack.c.l.b16 %v233
      %v385 = vunpack.c.l.b16 %v234
      %v386 = vunpack.c.l.b16 %v235
      %v387 = vunpack.c.l.b16 %v236
      %v388 = vunpack.c.l.b16 %v237
      %v389 = vunpack.c.l.b16 %v238
      %v390 = vunpack.c.l.b16 %v239
      %v391 = vunpack.c.l.b16 %v240
      %v392 = vunpack.c.l.b16 %v241
      %v393 = vunpack.c.l.b16 %v242
      %v394 = vunpack.c.l.b16 %v243
      %v395 = vunpack.c.l.b16 %v244
      %v396 = vunpack.c.l.b16 %v245
      %v397 = vunpack.c.l.b16 %v246
      %v398 = vunpack.c.l.b16 %v247
      %v399 = vunpack.c.l.b16 %v248
      %v400 = vunpack.c.l.b16 %v249
      %v401 = vunpack.c.l.b16 %v250
      %v402 = vunpack.c.l.b16 %v251
      %v403 = vunpack.c.l.b16 %v252
      %v404 = vpack.c.b16 %v373, %v372
      %v405 = vpack.c.b16 %v375, %v374
      %v406 = vpack.c.b16 %v377, %v376
      %v407 = vpack.c.b16 %v379, %v378
      %v408 = vpack.c.b16 %v381, %v380
      %v409 = vpack.c.b16 %v383, %v382
      %v410 = vpack.c.b16 %v385, %v384
      %v411 = vpack.c.b16 %v387, %v386
      %v412 = vpack.c.b16 %v389, %v388
      %v413 = vpack.c.b16 %v391, %v390
      %v414 = vpack.c.b16 %v393, %v392
      %v415 = vpack.c.b16 %v395, %v394
      %v416 = vpack.c.b16 %v397, %v396
      %v417 = vpack.c.b16 %v399, %v398
      %v418 = vpack.c.b16 %v401, %v400
      %v419 = vpack.c.b16 %v403, %v402
      %436 = vmatprep.subr.bf16.mxu0 0
      %437 = vmatpush1.bf16.msra.mxu0 %v404
      %438 = vmatprep.subr.bf16.mxu0 0
      %439 = vmatpush1.bf16.msra.mxu0 %v405
      %440 = vmatprep.subr.bf16.mxu0 0
      %441 = vmatpush1.bf16.msra.mxu0 %v406
      %442 = vmatprep.subr.bf16.mxu0 0
      %443 = vmatpush1.bf16.msra.mxu0 %v407
      %444 = vmatprep.subr.bf16.mxu0 0
      %445 = vmatpush1.bf16.msra.mxu0 %v408
      %446 = vmatprep.subr.bf16.mxu0 0
      %447 = vmatpush1.bf16.msra.mxu0 %v409
      %448 = vmatprep.subr.bf16.mxu0 0
      %449 = vmatpush1.bf16.msra.mxu0 %v410
      %450 = vmatprep.subr.bf16.mxu0 0
      %451 = vmatpush1.bf16.msra.mxu0 %v411
      %452 = vmatprep.subr.bf16.mxu0 0
      %453 = vmatpush1.bf16.msra.mxu0 %v412
      %454 = vmatprep.subr.bf16.mxu0 0
      %455 = vmatpush1.bf16.msra.mxu0 %v413
      %456 = vmatprep.subr.bf16.mxu0 0
      %457 = vmatpush1.bf16.msra.mxu0 %v414
      %458 = vmatprep.subr.bf16.mxu0 0
      %459 = vmatpush1.bf16.msra.mxu0 %v415
      %460 = vmatprep.subr.bf16.mxu0 0
      %461 = vmatpush1.bf16.msra.mxu0 %v416
      %462 = vmatprep.subr.bf16.mxu0 0
      %463 = vmatpush1.bf16.msra.mxu0 %v417
      %464 = vmatprep.subr.bf16.mxu0 0
      %465 = vmatpush1.bf16.msra.mxu0 %v418
      %466 = vmatprep.subr.bf16.mxu0 0
      %467 = vmatpush1.bf16.msra.mxu0 %v419
      %468 = vmatprep.mubr.bf16.mxu0 %v309
      %469 = vmatmul.mubr.bf16.gmra.mrb[0].mxu0 %v308
      %v470 = vpop.f32.mrb[0].mxu0
      %v471 = vadd.f32 %v258, %v470
      %v472 = vpop.f32.mrb[0].mxu0
      %v473 = vpop.f32.mrb[0].mxu0
      %v474 = vadd.f32 %v258, %v473
      %v475 = vpop.f32.mrb[0].mxu0
      %476 = vmatprep.mubr.bf16.mxu0 %v311
      %477 = vmatmul.mubr.bf16.gmra.mrb[0].mxu0 %v310
      %v478 = vpop.f32.mrb[0].mxu0
      %v479 = vadd.f32 %v258, %v478
      %v480 = vpop.f32.mrb[0].mxu0
      %v481 = vpop.f32.mrb[0].mxu0
      %v482 = vadd.f32 %v258, %v481
      %v483 = vpop.f32.mrb[0].mxu0
      %484 = vmatprep.mubr.bf16.mxu0 %v313
      %485 = vmatmul.mubr.bf16.gmra.mrb[0].mxu0 %v312
      %v486 = vpop.f32.mrb[0].mxu0
      %v487 = vadd.f32 %v258, %v486
      %v488 = vpop.f32.mrb[0].mxu0
      %v489 = vpop.f32.mrb[0].mxu0
      %v490 = vadd.f32 %v258, %v489
      %v491 = vpop.f32.mrb[0].mxu0
      %492 = vmatprep.mubr.bf16.mxu0 %v315
      %493 = vmatmul.mubr.bf16.gmra.mrb[0].mxu0 %v314
      %v494 = vpop.f32.mrb[0].mxu0
      %v495 = vadd.f32 %v258, %v494
      %v496 = vpop.f32.mrb[0].mxu0
      %v497 = vpop.f32.mrb[0].mxu0
      %v498 = vadd.f32 %v258, %v497
      %v499 = vpop.f32.mrb[0].mxu0
      %500 = vmatprep.mubr.bf16.mxu0 %v317
      %501 = vmatmul.mubr.bf16.gmra.mrb[0].mxu0 %v316
      %v502 = vpop.f32.mrb[0].mxu0
      %v503 = vadd.f32 %v258, %v502
      %v504 = vpop.f32.mrb[0].mxu0
      %v505 = vpop.f32.mrb[0].mxu0
      %v506 = vadd.f32 %v258, %v505
      %v507 = vpop.f32.mrb[0].mxu0
      %508 = vmatprep.mubr.bf16.mxu0 %v319
      %509 = vmatmul.mubr.bf16.gmra.mrb[0].mxu0 %v318
      %v510 = vpop.f32.mrb[0].mxu0
      %v511 = vadd.f32 %v258, %v510
      %v512 = vpop.f32.mrb[0].mxu0
      %v513 = vpop.f32.mrb[0].mxu0
      %v514 = vadd.f32 %v258, %v513
      %v515 = vpop.f32.mrb[0].mxu0
      %516 = vmatprep.mubr.bf16.mxu0 %v321
      %517 = vmatmul.mubr.bf16.gmra.mrb[0].mxu0 %v320
      %v518 = vpop.f32.mrb[0].mxu0
      %v519 = vadd.f32 %v258, %v518
      %v520 = vpop.f32.mrb[0].mxu0
      %v521 = vpop.f32.mrb[0].mxu0
      %v522 = vadd.f32 %v258, %v521
      %v523 = vpop.f32.mrb[0].mxu0
      %524 = vmatprep.mubr.bf16.mxu0 %v323
      %525 = vmatmul.mubr.bf16.gmra.mrb[0].mxu0 %v322
      %v526 = vpop.f32.mrb[0].mxu0
      %v527 = vadd.f32 %v258, %v526
      %v528 = vpop.f32.mrb[0].mxu0
      %v529 = vpop.f32.mrb[0].mxu0
      %v530 = vadd.f32 %v258, %v529
      %v531 = vpop.f32.mrb[0].mxu0
      %532 = vdwg.mxu0
      %v533 = vmax.f32 %v471, 0.0
      %v534 = vmax.f32 %v474, 0.0
      %v535 = vmax.f32 %v479, 0.0
      %v536 = vmax.f32 %v482, 0.0
      %v537 = vmax.f32 %v487, 0.0
      %v538 = vmax.f32 %v490, 0.0
      %v539 = vmax.f32 %v495, 0.0
      %v540 = vmax.f32 %v498, 0.0
      %v541 = vmax.f32 %v503, 0.0
      %v542 = vmax.f32 %v506, 0.0
      %v543 = vmax.f32 %v511, 0.0
      %v544 = vmax.f32 %v514, 0.0
      %v545 = vmax.f32 %v519, 0.0
      %v546 = vmax.f32 %v522, 0.0
      %v547 = vmax.f32 %v527, 0.0
      %v548 = vmax.f32 %v530, 0.0
      %v549 = vpack.c.bf16 %v534, %v533
      %v550 = vpack.c.bf16 %v536, %v535
      %v551 = vpack.c.bf16 %v538, %v537
      %v552 = vpack.c.bf16 %v540, %v539
      %v553 = vpack.c.bf16 %v542, %v541
      %v554 = vpack.c.bf16 %v544, %v543
      %v555 = vpack.c.bf16 %v546, %v545
      %v556 = vpack.c.bf16 %v548, %v547
      %v557 = vld [vmem:[%s3] sm:$0xf]
      %v558 = vld [vmem:[%s3 + $0x4] sm:$0xf]
      %v559 = vld [vmem:[%s3 + $0x8] sm:$0xf]
      %v560 = vld [vmem:[%s3 + $0xc] sm:$0xf]
      %v561 = vld [vmem:[%s3 + $0x10] sm:$0xf]
      %v562 = vld [vmem:[%s3 + $0x14] sm:$0xf]
      %v563 = vld [vmem:[%s3 + $0x18] sm:$0xf]
      %v564 = vld [vmem:[%s3 + $0x1c] sm:$0xf]
      %v565 = vld [vmem:[%s3 + $0x20] sm:$0xf]
      %v566 = vld [vmem:[%s3 + $0x24] sm:$0xf]
      %v567 = vld [vmem:[%s3 + $0x28] sm:$0xf]
      %v568 = vld [vmem:[%s3 + $0x2c] sm:$0xf]
      %v569 = vld [vmem:[%s3 + $0x30] sm:$0xf]
      %v570 = vld [vmem:[%s3 + $0x34] sm:$0xf]
      %v571 = vld [vmem:[%s3 + $0x38] sm:$0xf]
      %v572 = vld [vmem:[%s3 + $0x3c] sm:$0xf]
      %v589 = vunpack.c.l.b16 %v557
      %v590 = vunpack.c.l.b16 %v558
      %v591 = vunpack.c.l.b16 %v559
      %v592 = vunpack.c.l.b16 %v560
      %v593 = vunpack.c.l.b16 %v561
      %v594 = vunpack.c.l.b16 %v562
      %v595 = vunpack.c.l.b16 %v563
      %v596 = vunpack.c.l.b16 %v564
      %v597 = vunpack.c.l.b16 %v565
      %v598 = vunpack.c.l.b16 %v566
      %v599 = vunpack.c.l.b16 %v567
      %v600 = vunpack.c.l.b16 %v568
      %v601 = vunpack.c.l.b16 %v569
      %v602 = vunpack.c.l.b16 %v570
      %v603 = vunpack.c.l.b16 %v571
      %v604 = vunpack.c.l.b16 %v572
      %v605 = vpack.c.b16 %v590, %v589
      %v606 = vpack.c.b16 %v592, %v591
      %v607 = vpack.c.b16 %v594, %v593
      %v608 = vpack.c.b16 %v596, %v595
      %v609 = vpack.c.b16 %v598, %v597
      %v610 = vpack.c.b16 %v600, %v599
      %v611 = vpack.c.b16 %v602, %v601
      %v612 = vpack.c.b16 %v604, %v603
      %621 = vmatprep.subr.bf16.mxu0 0
      %622 = vmatpush1.bf16.msra.mxu0 %v605
      %623 = vmatprep.subr.bf16.mxu0 0
      %624 = vmatpush1.bf16.msra.mxu0 %v606
      %625 = vmatprep.subr.bf16.mxu0 0
      %626 = vmatpush1.bf16.msra.mxu0 %v607
      %627 = vmatprep.subr.bf16.mxu0 0
      %628 = vmatpush1.bf16.msra.mxu0 %v608
      %629 = vmatprep.subr.bf16.mxu0 0
      %630 = vmatpush1.bf16.msra.mxu0 %v609
      %631 = vmatprep.subr.bf16.mxu0 0
      %632 = vmatpush1.bf16.msra.mxu0 %v610
      %633 = vmatprep.subr.bf16.mxu0 0
      %634 = vmatpush1.bf16.msra.mxu0 %v611
      %635 = vmatprep.subr.bf16.mxu0 0
      %636 = vmatpush1.bf16.msra.mxu0 %v612
      %637 = vmatprep.subr.bf16.mxu0 0
      %638 = vmatpush1.bf16.msra.mxu0 0
      %639 = vmatprep.subr.bf16.mxu0 0
      %640 = vmatpush1.bf16.msra.mxu0 0
      %641 = vmatprep.subr.bf16.mxu0 0
      %642 = vmatpush1.bf16.msra.mxu0 0
      %643 = vmatprep.subr.bf16.mxu0 0
      %644 = vmatpush1.bf16.msra.mxu0 0
      %645 = vmatprep.subr.bf16.mxu0 0
      %646 = vmatpush1.bf16.msra.mxu0 0
      %647 = vmatprep.subr.bf16.mxu0 0
      %648 = vmatpush1.bf16.msra.mxu0 0
      %649 = vmatprep.subr.bf16.mxu0 0
      %650 = vmatpush1.bf16.msra.mxu0 0
      %651 = vmatprep.subr.bf16.mxu0 0
      %652 = vmatpush1.bf16.msra.mxu0 0
      %653 = vmatprep.mubr.bf16.mxu0 0
      %654 = vmatmul.mubr.bf16.gmra.mrb[0].mxu0 %v549
      %v655 = vpop.f32.mrb[0].mxu0
      %v656 = vadd.f32 0.0, %v655
      %v657 = vpop.f32.mrb[0].mxu0
      %v658 = vpop.f32.mrb[0].mxu0
      %v659 = vadd.f32 0.0, %v658
      %v660 = vpop.f32.mrb[0].mxu0
      %661 = vmatprep.mubr.bf16.mxu0 0
      %662 = vmatmul.mubr.bf16.gmra.mrb[0].mxu0 %v550
      %v663 = vpop.f32.mrb[0].mxu0
      %v664 = vadd.f32 0.0, %v663
      %v665 = vpop.f32.mrb[0].mxu0
      %v666 = vpop.f32.mrb[0].mxu0
      %v667 = vadd.f32 0.0, %v666
      %v668 = vpop.f32.mrb[0].mxu0
      %669 = vmatprep.mubr.bf16.mxu0 0
      %670 = vmatmul.mubr.bf16.gmra.mrb[0].mxu0 %v551
      %v671 = vpop.f32.mrb[0].mxu0
      %v672 = vadd.f32 0.0, %v671
      %v673 = vpop.f32.mrb[0].mxu0
      %v674 = vpop.f32.mrb[0].mxu0
      %v675 = vadd.f32 0.0, %v674
      %v676 = vpop.f32.mrb[0].mxu0
      %677 = vmatprep.mubr.bf16.mxu0 0
      %678 = vmatmul.mubr.bf16.gmra.mrb[0].mxu0 %v552
      %v679 = vpop.f32.mrb[0].mxu0
      %v680 = vadd.f32 0.0, %v679
      %v681 = vpop.f32.mrb[0].mxu0
      %v682 = vpop.f32.mrb[0].mxu0
      %v683 = vadd.f32 0.0, %v682
      %v684 = vpop.f32.mrb[0].mxu0
      %685 = vmatprep.mubr.bf16.mxu0 0
      %686 = vmatmul.mubr.bf16.gmra.mrb[0].mxu0 %v553
      %v687 = vpop.f32.mrb[0].mxu0
      %v688 = vadd.f32 0.0, %v687
      %v689 = vpop.f32.mrb[0].mxu0
      %v690 = vpop.f32.mrb[0].mxu0
      %v691 = vadd.f32 0.0, %v690
      %v692 = vpop.f32.mrb[0].mxu0
      %693 = vmatprep.mubr.bf16.mxu0 0
      %694 = vmatmul.mubr.bf16.gmra.mrb[0].mxu0 %v554
      %v695 = vpop.f32.mrb[0].mxu0
      %v696 = vadd.f32 0.0, %v695
      %v697 = vpop.f32.mrb[0].mxu0
      %v698 = vpop.f32.mrb[0].mxu0
      %v699 = vadd.f32 0.0, %v698
      %v700 = vpop.f32.mrb[0].mxu0
      %701 = vmatprep.mubr.bf16.mxu0 0
      %702 = vmatmul.mubr.bf16.gmra.mrb[0].mxu0 %v555
      %v703 = vpop.f32.mrb[0].mxu0
      %v704 = vadd.f32 0.0, %v703
      %v705 = vpop.f32.mrb[0].mxu0
      %v706 = vpop.f32.mrb[0].mxu0
      %v707 = vadd.f32 0.0, %v706
      %v708 = vpop.f32.mrb[0].mxu0
      %709 = vmatprep.mubr.bf16.mxu0 0
      %710 = vmatmul.mubr.bf16.gmra.mrb[0].mxu0 %v556
      %v711 = vpop.f32.mrb[0].mxu0
      %v712 = vadd.f32 0.0, %v711
      %v713 = vpop.f32.mrb[0].mxu0
      %v714 = vpop.f32.mrb[0].mxu0
      %v715 = vadd.f32 0.0, %v714
      %v716 = vpop.f32.mrb[0].mxu0
      %717 = vdwg.mxu0
      %v718 = vpack.c.bf16 %v659, %v656
      %v719 = vpack.c.bf16 %v667, %v664
      %v720 = vpack.c.bf16 %v675, %v672
      %v721 = vpack.c.bf16 %v683, %v680
      %v722 = vpack.c.bf16 %v691, %v688
      %v723 = vpack.c.bf16 %v699, %v696
      %v724 = vpack.c.bf16 %v707, %v704
      %v725 = vpack.c.bf16 %v715, %v712
      %v734 = vunpack.c.l.b16 %v718
      %v735 = vunpack.c.h.b16 %v718
      %v736 = vunpack.c.l.b16 %v719
      %v737 = vunpack.c.h.b16 %v719
      %v738 = vunpack.c.l.b16 %v720
      %v739 = vunpack.c.h.b16 %v720
      %v740 = vunpack.c.l.b16 %v721
      %v741 = vunpack.c.h.b16 %v721
      %v742 = vunpack.c.l.b16 %v722
      %v743 = vunpack.c.h.b16 %v722
      %v744 = vunpack.c.l.b16 %v723
      %v745 = vunpack.c.h.b16 %v723
      %v746 = vunpack.c.l.b16 %v724
      %v747 = vunpack.c.h.b16 %v724
      %v748 = vunpack.c.l.b16 %v725
      %v749 = vunpack.c.h.b16 %v725
      %v750 = vpack.c.b16 %v734, %v734
      %v751 = vpack.c.b16 %v735, %v735
      %v752 = vpack.c.b16 %v736, %v736
      %v753 = vpack.c.b16 %v737, %v737
      %v754 = vpack.c.b16 %v738, %v738
      %v755 = vpack.c.b16 %v739, %v739
      %v756 = vpack.c.b16 %v740, %v740
      %v757 = vpack.c.b16 %v741, %v741
      %v758 = vpack.c.b16 %v742, %v742
      %v759 = vpack.c.b16 %v743, %v743
      %v760 = vpack.c.b16 %v744, %v744
      %v761 = vpack.c.b16 %v745, %v745
      %v762 = vpack.c.b16 %v746, %v746
      %v763 = vpack.c.b16 %v747, %v747
      %v764 = vpack.c.b16 %v748, %v748
      %v765 = vpack.c.b16 %v749, %v749
      %782 = vst [vmem:[%s202] sm:$0xf] %v750
      %783 = vst [vmem:[%s202 + $0x4] sm:$0xf] %v751
      %784 = vst [vmem:[%s202 + $0x8] sm:$0xf] %v752
      %785 = vst [vmem:[%s202 + $0xc] sm:$0xf] %v753
      %786 = vst [vmem:[%s202 + $0x10] sm:$0xf] %v754
      %787 = vst [vmem:[%s202 + $0x14] sm:$0xf] %v755
      %788 = vst [vmem:[%s202 + $0x18] sm:$0xf] %v756
      %789 = vst [vmem:[%s202 + $0x1c] sm:$0xf] %v757
      %790 = vst [vmem:[%s202 + $0x20] sm:$0xf] %v758
      %791 = vst [vmem:[%s202 + $0x24] sm:$0xf] %v759
      %792 = vst [vmem:[%s202 + $0x28] sm:$0xf] %v760
      %793 = vst [vmem:[%s202 + $0x2c] sm:$0xf] %v761
      %794 = vst [vmem:[%s202 + $0x30] sm:$0xf] %v762
      %795 = vst [vmem:[%s202 + $0x34] sm:$0xf] %v763
      %796 = vst [vmem:[%s202 + $0x38] sm:$0xf] %v764
      %797 = vst [vmem:[%s202 + $0x3c] sm:$0xf] %v765
      %s798 = smul.u32 16, %s15
      %p799 = scmp.lt.s32.totalorder %s798, 31
      %s800 = scalar_select %p799, %s798, 31
      %s801 = smul.addr %s800, 4
      %s802 = scalar_lea.vmem %s4, %s801
      // Predicated region
      $region37: #{gcn_forward.4} parent=35 // pred_check
        %p803 = pneg %p122
      $region38: #{gcn_forward.4} parent=35 // pred_check_branch
        %805 = sbr.rel (%p803) target = $region40
      $region39: #{gcn_forward.4} parent=35 // pred_region
        %s806 = smul.u32 16, %s15
      $region40: #{gcn_forward.4} parent=35 // pred_fallthru
        _
    $region36: #{gcn_forward.4} parent=5 // pred_fallthru
      _
    %p807 = scmp.le.s32.totalorder 2, %s10
    // Predicated region
    $region41: #{gcn_forward.4} parent=5 // pred_check
      %p808 = pneg %p807
    $region42: #{gcn_forward.4} parent=5 // pred_check_branch
      %810 = sbr.rel (%p808) target = $region44
    $region43: #{gcn_forward.4} parent=5 // pred_region
      %s811 = ssub.s32 %s10, 2
      // Predicated region
      $region45: #{gcn_forward.4} parent=43 // pred_check
        %p812 = pneg %p128
      $region46: #{gcn_forward.4} parent=43 // pred_check_branch
        %814 = sbr.rel (%p812) target = $region48
      $region47: #{gcn_forward.4} parent=43 // pred_region
        %s815 = smul.u32 16, %s16
        %p816 = scmp.lt.s32.totalorder %s815, 31
        %s817 = scalar_select %p816, %s815, 31
        %s818 = smul.addr %s817, 4
        %s819 = scalar_lea.vmem %s4, %s818
      $region48: #{gcn_forward.4} parent=43 // pred_fallthru
        _
    $region44: #{gcn_forward.4} parent=5 // pred_fallthru
      _
  $region6: #{gcn_forward.4} parent=0 // loop_footer
    %s14 = sadd.s32 1, %s10
  $region7: #{gcn_forward.4} parent=0 // loop_footer_branch
    %9 = sbr.rel target = $region3
  $region8: #{gcn_forward.4} parent=0 // loop_exit
    _

</llo_original>
